<compile_context>
chip_gen: v7x
topology: tpu7x:2x2x1
jax: 0.10.0
libtpu: 0.0.40
codegen_flags: <defaults>
</compile_context>

<pallas_src>
import functools

import jax
import jax.numpy as jnp
import numpy as np
from jax.experimental import pallas as pl
from jax.experimental.pallas import tpu as pltpu


def _round_up(x, m):
    return (x + m - 1) // m * m


def _lstm_attn_decoder_kernel(
    # inputs
    xh_ref, mem_ref, h_ref, c_ref,
    w_hc_ref, b_hc_ref, w_mc_ref, b_mc_ref, v_ref,
    w_gate_ref, b_gate_ref,
    # outputs
    h_out_ref, c_out_ref, w_out_ref,
    # scratch
    q_sc, m_sc, l_sc, acc_sc, lstm_in_sc,
    *, S,
):
    si = pl.program_id(1)
    ns = pl.num_programs(1)

    tb, ts, E = mem_ref.shape
    A_pad = w_mc_ref.shape[-1]
    H_pad = h_ref.shape[-1]
    K1_pad = xh_ref.shape[-1]
    S_pad = w_out_ref.shape[-1]

    # ---- per-batch-tile init: query + online-softmax state ----
    @pl.when(si == 0)
    def _init():
        q_sc[...] = (jnp.dot(h_ref[...], w_hc_ref[...],
                             preferred_element_type=jnp.float32)
                     + b_hc_ref[...])
        m_sc[...] = jnp.full(m_sc.shape, -jnp.inf, m_sc.dtype)
        l_sc[...] = jnp.zeros(l_sc.shape, l_sc.dtype)
        acc_sc[...] = jnp.zeros(acc_sc.shape, acc_sc.dtype)

    # ---- additive attention over this S chunk ----
    mem = mem_ref[...]                                         # (tb, ts, E)
    # Mc(memory): single flat MXU pass (tb*ts, E) @ (E, A_pad)
    attn_m = (jnp.dot(mem.reshape(tb * ts, E), w_mc_ref[...],
                      preferred_element_type=jnp.float32)
              + b_mc_ref[...]).reshape(tb, ts, A_pad)

    t = jnp.tanh(q_sc[...][:, None, :] + attn_m)               # (tb, ts, A_pad)
    # VPU multiply + lane reduce (avoid a degenerate N=1 MXU pass against v)
    scores = jnp.sum(t * v_ref[...][None], axis=-1)            # (tb, ts)

    # mask padded S positions (padding < ts, so every chunk has a valid slot)
    pos = si * ts + jax.lax.broadcasted_iota(jnp.int32, (tb, ts), 1)
    scores = jnp.where(pos < S, scores, -jnp.inf)

    # stash raw scores into the resident, lane-padded weight output block
    if ts == S_pad:
        # single S chunk: plain full-block store
        w_out_ref[...] = scores
    else:
        # ts is a multiple of 128 here, so the dynamic offset is lane-aligned
        off = pl.multiple_of(si * ts, 128)
        w_out_ref[:, pl.ds(off, ts)] = scores

    # ---- online softmax update ----
    m_old = m_sc[...]                                          # (tb, 1)
    m_new = jnp.maximum(m_old, jnp.max(scores, axis=-1, keepdims=True))
    alpha = jnp.exp(m_old - m_new)                             # (tb, 1)
    p = jnp.exp(scores - m_new)                                # (tb, ts)
    l_sc[...] = alpha * l_sc[...] + jnp.sum(p, axis=-1, keepdims=True)
    acc_sc[...] = alpha * acc_sc[...] + jnp.sum(p[:, :, None] * attn_m, axis=1)
    m_sc[...] = m_new

    # ---- finalize: context, fused LSTM cell, normalized weights ----
    @pl.when(si == ns - 1)
    def _finalize():
        inv_l = 1.0 / l_sc[...]                                # exact (f32 parity)
        ctx = acc_sc[...] * inv_l                              # (tb, A_pad)

        # single fused gate matmul: [x | h | ctx] @ W_gate, K = K1_pad + A_pad
        lstm_in_sc[:, :K1_pad] = xh_ref[...]
        lstm_in_sc[:, K1_pad:] = ctx
        gates = (jnp.dot(lstm_in_sc[...], w_gate_ref[...],
                         preferred_element_type=jnp.float32)
                 + b_gate_ref[...])                            # (tb, 4*H_pad)

        i_g = jax.nn.sigmoid(gates[:, 0 * H_pad:1 * H_pad])
        f_g = jax.nn.sigmoid(gates[:, 1 * H_pad:2 * H_pad])
        g_g = jnp.tanh(gates[:, 2 * H_pad:3 * H_pad])
        o_g = jax.nn.sigmoid(gates[:, 3 * H_pad:4 * H_pad])

        c_new = f_g * c_ref[...] + i_g * g_g
        h_out_ref[...] = o_g * jnp.tanh(c_new)
        c_out_ref[...] = c_new

        # normalize the stashed raw scores -> attention weights (padded -> 0)
        w_out_ref[...] = jnp.exp(w_out_ref[...] - m_sc[...]) * inv_l


@functools.partial(jax.jit, static_argnames=('output_weights',))
def lstm_attn_decoder(x, memory, hidden, cell, params, output_weights=True):
    f32 = jnp.float32
    B, V = x.shape
    _, S, E = memory.shape
    H = hidden.shape[-1]
    A = params['w_hc'].shape[-1]

    # tiling / padding: lane dims -> multiples of 128, batch -> multiples of 8
    tb = 8
    B_pad = _round_up(B, tb)
    ts = 128 if S >= 128 else _round_up(S, 8)
    S_pad = _round_up(S, ts)
    A_pad = _round_up(A, 128)
    H_pad = _round_up(H, 128)
    K1 = V + H
    K1_pad = _round_up(K1, 128)
    K_total = K1_pad + A_pad

    def pad_to(a, shape):
        a = a.astype(f32)
        return jnp.pad(a, [(0, s - d) for s, d in zip(shape, a.shape)])

    # --- per-step activations ---
    xh_p = pad_to(jnp.concatenate([x, hidden], axis=-1), (B_pad, K1_pad))
    mem_p = pad_to(memory, (B_pad, S_pad, E))
    h_p = pad_to(hidden, (B_pad, H_pad))
    c_p = pad_to(cell, (B_pad, H_pad))

    # --- parameters (hoist these pads/concats out of a real decode loop) ---
    w_hc_p = pad_to(params['w_hc'], (H_pad, A_pad))
    b_hc_p = pad_to(params['b_hc'], (1, A_pad))
    w_mc_p = pad_to(params['w_mc'], (E, A_pad))
    b_mc_p = pad_to(params['b_mc'], (1, A_pad))
    v_p = pad_to(params['v'], (1, A_pad))

    def pad_gate_cols(w):  # [in, 4H] -> [in, 4*H_pad], each gate 128-aligned
        n = w.shape[0]
        w4 = w.astype(f32).reshape(n, 4, H)
        w4 = jnp.pad(w4, ((0, 0), (0, 0), (0, H_pad - H)))
        return w4.reshape(n, 4 * H_pad)

    w_xh = jnp.concatenate(
        [pad_gate_cols(params['w_ih_x']), pad_gate_cols(params['w_hh'])], axis=0)
    w_xh = jnp.pad(w_xh, ((0, K1_pad - K1), (0, 0)))
    w_c = jnp.pad(pad_gate_cols(params['w_ih_c']), ((0, A_pad - A), (0, 0)))
    w_gate = jnp.concatenate([w_xh, w_c], axis=0)            # [K_total, 4*H_pad]
    b_gate = pad_gate_cols(params['b_ih'] + params['b_hh'])  # [1, 4*H_pad]

    grid = (B_pad // tb, S_pad // ts)
    b_map = lambda bi, si: (bi, 0)
    const_map = lambda bi, si: (0, 0)

    kernel = functools.partial(_lstm_attn_decoder_kernel, S=S)

    h_new, c_new, w = pl.pallas_call(
        kernel,
        grid=grid,
        in_specs=[
            pl.BlockSpec((tb, K1_pad), b_map),                       # [x | h]
            pl.BlockSpec((tb, ts, E), lambda bi, si: (bi, si, 0)),   # memory
            pl.BlockSpec((tb, H_pad), b_map),                        # hidden
            pl.BlockSpec((tb, H_pad), b_map),                        # cell
            pl.BlockSpec((H_pad, A_pad), const_map),                 # w_hc
            pl.BlockSpec((1, A_pad), const_map),                     # b_hc
            pl.BlockSpec((E, A_pad), const_map),                     # w_mc
            pl.BlockSpec((1, A_pad), const_map),                     # b_mc
            pl.BlockSpec((1, A_pad), const_map),                     # v
            pl.BlockSpec((K_total, 4 * H_pad), const_map),           # w_gate
            pl.BlockSpec((1, 4 * H_pad), const_map),                 # b_gate
        ],
        out_specs=(
            pl.BlockSpec((tb, H_pad), b_map),
            pl.BlockSpec((tb, H_pad), b_map),
            pl.BlockSpec((tb, S_pad), b_map),
        ),
        out_shape=(
            jax.ShapeDtypeStruct((B_pad, H_pad), f32),
            jax.ShapeDtypeStruct((B_pad, H_pad), f32),
            jax.ShapeDtypeStruct((B_pad, S_pad), f32),
        ),
        scratch_shapes=[
            pltpu.VMEM((tb, A_pad), f32),       # q = Hc(hidden)
            pltpu.VMEM((tb, 1), f32),           # running max
            pltpu.VMEM((tb, 1), f32),           # running exp-sum
            pltpu.VMEM((tb, A_pad), f32),       # running context accumulator
            pltpu.VMEM((tb, K_total), f32),     # fused LSTM input slab
        ],
        compiler_params=pltpu.CompilerParams(
            dimension_semantics=("parallel", "arbitrary"),
            vmem_limit_bytes=32 * 1024 * 1024),
    )(xh_p, mem_p, h_p, c_p, w_hc_p, b_hc_p, w_mc_p, b_mc_p, v_p,
      w_gate, b_gate)

    h_new = h_new[:B, :H]
    c_new = c_new[:B, :H]
    if output_weights:
        return h_new, c_new, w[:B, :S]
    return h_new, c_new, None


def reference_forward(x, memory, hidden, cell, params):
    """Pure-JAX reference mirroring the PyTorch module."""
    attn_h = hidden @ params['w_hc'] + params['b_hc']
    attn_m = jnp.einsum('bse,ea->bsa', memory, params['w_mc']) + params['b_mc']
    t = jnp.tanh(attn_h[:, None, :] + attn_m)
    scores = jnp.einsum('bsa,a->bs', t, params['v'][0])
    weight = jax.nn.softmax(scores, axis=-1)
    ctx = jnp.einsum('bs,bsa->ba', weight, attn_m)
    lstm_in = jnp.concatenate([x, ctx], axis=-1)
    w_ih = jnp.concatenate([params['w_ih_x'], params['w_ih_c']], axis=0)
    gates = lstm_in @ w_ih + params['b_ih'] + hidden @ params['w_hh'] + params['b_hh']
    H = hidden.shape[-1]
    i_g = jax.nn.sigmoid(gates[:, 0 * H:1 * H])
    f_g = jax.nn.sigmoid(gates[:, 1 * H:2 * H])
    g_g = jnp.tanh(gates[:, 2 * H:3 * H])
    o_g = jax.nn.sigmoid(gates[:, 3 * H:4 * H])
    c_new = f_g * cell + i_g * g_g
    h_new = o_g * jnp.tanh(c_new)
    return h_new, c_new, weight


def init_params(key, input_size, memory_size, hidden_size, attn_size):
    ks = jax.random.split(key, 12)
    u = lambda k, shape, s: jax.random.uniform(k, shape, jnp.float32, -s, s)
    sh = 1.0 / np.sqrt(hidden_size)
    sa = 1.0 / np.sqrt(attn_size)
    return {
        # Hc: Linear(hidden_size -> attn_size), stored as [H, A]
        'w_hc': u(ks[0], (hidden_size, attn_size), sa),
        'b_hc': u(ks[1], (1, attn_size), sa),
        # Mc: Linear(memory_size -> attn_size), stored as [E, A]
        'w_mc': u(ks[2], (memory_size, attn_size), sa),
        'b_mc': u(ks[3], (1, attn_size), sa),
        # additive-attention scoring vector v: [1, A]
        'v': u(ks[4], (1, attn_size), sa),
        # LSTMCell(input_size + attn_size -> hidden_size),
        # W_ih split by input halves; stored transposed as [in, 4H]
        'w_ih_x': u(ks[5], (input_size, 4 * hidden_size), sh),
        'w_ih_c': u(ks[6], (attn_size, 4 * hidden_size), sh),
        'w_hh': u(ks[7], (hidden_size, 4 * hidden_size), sh),
        'b_ih': u(ks[8], (1, 4 * hidden_size), sh),
        'b_hh': u(ks[9], (1, 4 * hidden_size), sh),
    }


if __name__ == "__main__":
    B, V, E, H, A, S = 2, 8, 16, 32, 16, 8

    key = jax.random.PRNGKey(0)
    kp, kx, km, kh, kc = jax.random.split(key, 5)
    params = init_params(kp, V, E, H, A)

    x = jax.random.normal(kx, (B, V), jnp.float32)
    memory = jax.random.normal(km, (B, S, E), jnp.float32)
    hidden = jax.random.normal(kh, (B, H), jnp.float32)
    cell = jax.random.normal(kc, (B, H), jnp.float32)

    h_new, c_new, w = lstm_attn_decoder(x, memory, hidden, cell, params,
                                        output_weights=True)
    jax.block_until_ready((h_new, c_new, w))

    h_ref, c_ref, w_ref = reference_forward(x, memory, hidden, cell, params)
    np.testing.assert_allclose(np.asarray(h_new), np.asarray(h_ref),
                               rtol=1e-5, atol=1e-5)
    np.testing.assert_allclose(np.asarray(c_new), np.asarray(c_ref),
                               rtol=1e-5, atol=1e-5)
    np.testing.assert_allclose(np.asarray(w), np.asarray(w_ref),
                               rtol=1e-5, atol=1e-5)

    print("KERNEL_OK")
</pallas_src>

<mosaic_0001>
module attributes {stable_mosaic.version = 11 : i64} {
  func.func @_lstm_attn_decoder_kernel(%arg0: i32, %arg1: i32, %arg2: memref<8x128xf32, #tpu.memory_space<vmem>>, %arg3: memref<8x8x16xf32, #tpu.memory_space<vmem>>, %arg4: memref<8x128xf32, #tpu.memory_space<vmem>>, %arg5: memref<8x128xf32, #tpu.memory_space<vmem>>, %arg6: memref<128x128xf32, #tpu.memory_space<vmem>>, %arg7: memref<1x128xf32, #tpu.memory_space<vmem>>, %arg8: memref<16x128xf32, #tpu.memory_space<vmem>>, %arg9: memref<1x128xf32, #tpu.memory_space<vmem>>, %arg10: memref<1x128xf32, #tpu.memory_space<vmem>>, %arg11: memref<256x512xf32, #tpu.memory_space<vmem>>, %arg12: memref<1x512xf32, #tpu.memory_space<vmem>>, %arg13: memref<8x128xf32, #tpu.memory_space<vmem>>, %arg14: memref<8x128xf32, #tpu.memory_space<vmem>>, %arg15: memref<8x8xf32, #tpu.memory_space<vmem>>, %arg16: memref<8x128xf32, #tpu.memory_space<vmem>>, %arg17: memref<8x1xf32, #tpu.memory_space<vmem>>, %arg18: memref<8x1xf32, #tpu.memory_space<vmem>>, %arg19: memref<8x128xf32, #tpu.memory_space<vmem>>, %arg20: memref<8x256xf32, #tpu.memory_space<vmem>>) attributes {dimension_semantics = [#tpu.dimension_semantics<parallel>, #tpu.dimension_semantics<arbitrary>], iteration_bounds = array<i64: 1, 1>, scalar_prefetch = 0 : i64, scratch_operands = 5 : i64, tpu.core_type = #tpu.core_type<tc>, window_params = [{transform_indices = @transform_0, window_bounds = array<i64: 8, 128>}, {transform_indices = @transform_1, window_bounds = array<i64: 8, 8, 16>}, {transform_indices = @transform_2, window_bounds = array<i64: 8, 128>}, {transform_indices = @transform_3, window_bounds = array<i64: 8, 128>}, {pipeline_mode = #tpu.pipeline_mode<synchronous>, transform_indices = @transform_4, window_bounds = array<i64: 128, 128>}, {pipeline_mode = #tpu.pipeline_mode<synchronous>, transform_indices = @transform_5, window_bounds = array<i64: 1, 128>}, {pipeline_mode = #tpu.pipeline_mode<synchronous>, transform_indices = @transform_6, window_bounds = array<i64: 16, 128>}, {pipeline_mode = #tpu.pipeline_mode<synchronous>, transform_indices = @transform_7, window_bounds = array<i64: 1, 128>}, {pipeline_mode = #tpu.pipeline_mode<synchronous>, transform_indices = @transform_8, window_bounds = array<i64: 1, 128>}, {pipeline_mode = #tpu.pipeline_mode<synchronous>, transform_indices = @transform_9, window_bounds = array<i64: 256, 512>}, {pipeline_mode = #tpu.pipeline_mode<synchronous>, transform_indices = @transform_10, window_bounds = array<i64: 1, 512>}, {transform_indices = @transform_11, window_bounds = array<i64: 8, 128>}, {transform_indices = @transform_12, window_bounds = array<i64: 8, 128>}, {transform_indices = @transform_13, window_bounds = array<i64: 8, 8>}]} {
    %c0_i32 = arith.constant 0 : i32
    %0 = arith.cmpi eq, %arg1, %c0_i32 : i32
    %1 = arith.extui %0 : i1 to i32
    %c0_i32_0 = arith.constant 0 : i32
    %2 = arith.cmpi ne, %1, %c0_i32_0 : i32
    scf.if %2 {
      %c0_33 = arith.constant 0 : index
      %c0_34 = arith.constant 0 : index
      %58 = vector.load %arg4[%c0_33, %c0_34] : memref<8x128xf32, #tpu.memory_space<vmem>>, vector<8x128xf32>
      %c0_35 = arith.constant 0 : index
      %c0_36 = arith.constant 0 : index
      %59 = vector.load %arg6[%c0_35, %c0_36] : memref<128x128xf32, #tpu.memory_space<vmem>>, vector<128x128xf32>
      %cst_37 = arith.constant dense<0.000000e+00> : vector<8x128xf32>
      %60 = tpu.matmul %58, %59, %cst_37 {dimension_numbers = #tpu.dot_dimension_numbers<[1], [0], [0], [1], [0, 0, 1, 1], [], []>} : vector<8x128xf32>, vector<128x128xf32>, vector<8x128xf32> -> vector<8x128xf32>
      %c0_38 = arith.constant 0 : index
      %c0_39 = arith.constant 0 : index
      %61 = vector.load %arg7[%c0_38, %c0_39] : memref<1x128xf32, #tpu.memory_space<vmem>>, vector<1x128xf32>
      %62 = vector.broadcast %61 : vector<1x128xf32> to vector<8x128xf32>
      %63 = arith.addf %60, %62 : vector<8x128xf32>
      %c0_40 = arith.constant 0 : index
      %c0_41 = arith.constant 0 : index
      %64 = vector.load %arg16[%c0_40, %c0_41] : memref<8x128xf32, #tpu.memory_space<vmem>>, vector<8x128xf32>
      tpu.vector_store %arg16[%c0_40, %c0_41], %63 {strides = array<i32>} : memref<8x128xf32, #tpu.memory_space<vmem>>, vector<8x128xf32>,
      %cst_42 = arith.constant 0xFF800000 : f32
      %65 = vector.broadcast %cst_42 : f32 to vector<8x1xf32>
      %c0_43 = arith.constant 0 : index
      %c0_44 = arith.constant 0 : index
      %66 = vector.load %arg17[%c0_43, %c0_44] : memref<8x1xf32, #tpu.memory_space<vmem>>, vector<8x1xf32>
      tpu.vector_store %arg17[%c0_43, %c0_44], %65 {strides = array<i32>} : memref<8x1xf32, #tpu.memory_space<vmem>>, vector<8x1xf32>,
      %cst_45 = arith.constant 0.000000e+00 : f32
      %67 = vector.broadcast %cst_45 : f32 to vector<8x1xf32>
      %c0_46 = arith.constant 0 : index
      %c0_47 = arith.constant 0 : index
      %68 = vector.load %arg18[%c0_46, %c0_47] : memref<8x1xf32, #tpu.memory_space<vmem>>, vector<8x1xf32>
      tpu.vector_store %arg18[%c0_46, %c0_47], %67 {strides = array<i32>} : memref<8x1xf32, #tpu.memory_space<vmem>>, vector<8x1xf32>,
      %cst_48 = arith.constant 0.000000e+00 : f32
      %69 = vector.broadcast %cst_48 : f32 to vector<8x128xf32>
      %c0_49 = arith.constant 0 : index
      %c0_50 = arith.constant 0 : index
      %70 = vector.load %arg19[%c0_49, %c0_50] : memref<8x128xf32, #tpu.memory_space<vmem>>, vector<8x128xf32>
      tpu.vector_store %arg19[%c0_49, %c0_50], %69 {strides = array<i32>} : memref<8x128xf32, #tpu.memory_space<vmem>>, vector<8x128xf32>,
    } else {
    }
    %c0 = arith.constant 0 : index
    %c0_1 = arith.constant 0 : index
    %c0_2 = arith.constant 0 : index
    %3 = vector.load %arg3[%c0, %c0_1, %c0_2] : memref<8x8x16xf32, #tpu.memory_space<vmem>>, vector<8x8x16xf32>
    %4 = vector.shape_cast %3 : vector<8x8x16xf32> to vector<64x16xf32>
    %c0_3 = arith.constant 0 : index
    %c0_4 = arith.constant 0 : index
    %5 = vector.load %arg8[%c0_3, %c0_4] : memref<16x128xf32, #tpu.memory_space<vmem>>, vector<16x128xf32>
    %cst = arith.constant dense<0.000000e+00> : vector<64x128xf32>
    %6 = tpu.matmul %4, %5, %cst {dimension_numbers = #tpu.dot_dimension_numbers<[1], [0], [0], [1], [0, 0, 1, 1], [], []>} : vector<64x16xf32>, vector<16x128xf32>, vector<64x128xf32> -> vector<64x128xf32>
    %c0_5 = arith.constant 0 : index
    %c0_6 = arith.constant 0 : index
    %7 = vector.load %arg9[%c0_5, %c0_6] : memref<1x128xf32, #tpu.memory_space<vmem>>, vector<1x128xf32>
    %8 = vector.broadcast %7 : vector<1x128xf32> to vector<64x128xf32>
    %9 = arith.addf %6, %8 : vector<64x128xf32>
    %10 = vector.shape_cast %9 : vector<64x128xf32> to vector<8x8x128xf32>
    %c0_7 = arith.constant 0 : index
    %c0_8 = arith.constant 0 : index
    %11 = vector.load %arg16[%c0_7, %c0_8] : memref<8x128xf32, #tpu.memory_space<vmem>>, vector<8x128xf32>
    %12 = vector.shape_cast %11 : vector<8x128xf32> to vector<8x1x128xf32>
    %13 = vector.broadcast %12 : vector<8x1x128xf32> to vector<8x8x128xf32>
    %14 = arith.addf %13, %10 : vector<8x8x128xf32>
    %15 = math.tanh %14 : vector<8x8x128xf32>
    %c0_9 = arith.constant 0 : index
    %c0_10 = arith.constant 0 : index
    %16 = vector.load %arg10[%c0_9, %c0_10] : memref<1x128xf32, #tpu.memory_space<vmem>>, vector<1x128xf32>
    %17 = vector.shape_cast %16 : vector<1x128xf32> to vector<1x1x128xf32>
    %18 = vector.broadcast %17 : vector<1x1x128xf32> to vector<8x8x128xf32>
    %19 = arith.mulf %15, %18 : vector<8x8x128xf32>
    %cst_11 = arith.constant dense<0.000000e+00> : vector<8x8xf32>
    %20 = vector.multi_reduction <add>, %19, %cst_11 [2] : vector<8x8x128xf32> to vector<8x8xf32>
    %c8_i32 = arith.constant 8 : i32
    %21 = arith.muli %arg1, %c8_i32 : i32
    %22 = tpu.iota {dimensions = array<i32: 1>} : vector<8x8xi32>
    %23 = vector.broadcast %21 : i32 to vector<8x8xi32>
    %24 = arith.addi %23, %22 : vector<8x8xi32>
    %c8_i32_12 = arith.constant 8 : i32
    %25 = vector.broadcast %c8_i32_12 : i32 to vector<8x8xi32>
    %26 = arith.cmpi slt, %24, %25 : vector<8x8xi32>
    %cst_13 = arith.constant 0xFF800000 : f32
    %27 = vector.broadcast %cst_13 : f32 to vector<8x8xf32>
    %28 = arith.select %26, %20, %27 : vector<8x8xi1>, vector<8x8xf32>
    %c0_14 = arith.constant 0 : index
    %c0_15 = arith.constant 0 : index
    %29 = vector.load %arg15[%c0_14, %c0_15] : memref<8x8xf32, #tpu.memory_space<vmem>>, vector<8x8xf32>
    tpu.vector_store %arg15[%c0_14, %c0_15], %28 {strides = array<i32>} : memref<8x8xf32, #tpu.memory_space<vmem>>, vector<8x8xf32>,
    %c0_16 = arith.constant 0 : index
    %c0_17 = arith.constant 0 : index
    %30 = vector.load %arg17[%c0_16, %c0_17] : memref<8x1xf32, #tpu.memory_space<vmem>>, vector<8x1xf32>
    %cst_18 = arith.constant dense<0xFF800000> : vector<8xf32>
    %31 = vector.multi_reduction <maximumf>, %28, %cst_18 [1] : vector<8x8xf32> to vector<8xf32>
    %32 = vector.shape_cast %31 : vector<8xf32> to vector<8x1xf32>
    %33 = arith.maximumf %30, %32 : vector<8x1xf32>
    %34 = arith.subf %30, %33 : vector<8x1xf32>
    %35 = math.exp %34 : vector<8x1xf32>
    %36 = vector.broadcast %33 : vector<8x1xf32> to vector<8x8xf32>
    %37 = arith.subf %28, %36 : vector<8x8xf32>
    %38 = math.exp %37 : vector<8x8xf32>
    %c0_19 = arith.constant 0 : index
    %c0_20 = arith.constant 0 : index
    %39 = vector.load %arg18[%c0_19, %c0_20] : memref<8x1xf32, #tpu.memory_space<vmem>>, vector<8x1xf32>
    %40 = arith.mulf %35, %39 : vector<8x1xf32>
    %cst_21 = arith.constant dense<0.000000e+00> : vector<8xf32>
    %41 = vector.multi_reduction <add>, %38, %cst_21 [1] : vector<8x8xf32> to vector<8xf32>
    %42 = vector.shape_cast %41 : vector<8xf32> to vector<8x1xf32>
    %43 = arith.addf %40, %42 : vector<8x1xf32>
    %c0_22 = arith.constant 0 : index
    %c0_23 = arith.constant 0 : index
    %44 = vector.load %arg18[%c0_22, %c0_23] : memref<8x1xf32, #tpu.memory_space<vmem>>, vector<8x1xf32>
    tpu.vector_store %arg18[%c0_22, %c0_23], %43 {strides = array<i32>} : memref<8x1xf32, #tpu.memory_space<vmem>>, vector<8x1xf32>,
    %c0_24 = arith.constant 0 : index
    %c0_25 = arith.constant 0 : index
    %45 = vector.load %arg19[%c0_24, %c0_25] : memref<8x128xf32, #tpu.memory_space<vmem>>, vector<8x128xf32>
    %46 = vector.broadcast %35 : vector<8x1xf32> to vector<8x128xf32>
    %47 = arith.mulf %46, %45 : vector<8x128xf32>
    %48 = vector.shape_cast %38 : vector<8x8xf32> to vector<8x8x1xf32>
    %49 = vector.broadcast %48 : vector<8x8x1xf32> to vector<8x8x128xf32>
    %50 = arith.mulf %49, %10 : vector<8x8x128xf32>
    %cst_26 = arith.constant dense<0.000000e+00> : vector<8x128xf32>
    %51 = vector.multi_reduction <add>, %50, %cst_26 [1] : vector<8x8x128xf32> to vector<8x128xf32>
    %52 = arith.addf %47, %51 : vector<8x128xf32>
    %c0_27 = arith.constant 0 : index
    %c0_28 = arith.constant 0 : index
    %53 = vector.load %arg19[%c0_27, %c0_28] : memref<8x128xf32, #tpu.memory_space<vmem>>, vector<8x128xf32>
    tpu.vector_store %arg19[%c0_27, %c0_28], %52 {strides = array<i32>} : memref<8x128xf32, #tpu.memory_space<vmem>>, vector<8x128xf32>,
    %c0_29 = arith.constant 0 : index
    %c0_30 = arith.constant 0 : index
    %54 = vector.load %arg17[%c0_29, %c0_30] : memref<8x1xf32, #tpu.memory_space<vmem>>, vector<8x1xf32>
    tpu.vector_store %arg17[%c0_29, %c0_30], %33 {strides = array<i32>} : memref<8x1xf32, #tpu.memory_space<vmem>>, vector<8x1xf32>,
    %c0_i32_31 = arith.constant 0 : i32
    %55 = arith.cmpi eq, %arg1, %c0_i32_31 : i32
    %56 = arith.extui %55 : i1 to i32
    %c0_i32_32 = arith.constant 0 : i32
    %57 = arith.cmpi ne, %56, %c0_i32_32 : i32
    scf.if %57 {
      %c0_33 = arith.constant 0 : index
      %c0_34 = arith.constant 0 : index
      %58 = vector.load %arg18[%c0_33, %c0_34] : memref<8x1xf32, #tpu.memory_space<vmem>>, vector<8x1xf32>
      %cst_35 = arith.constant 1.000000e+00 : f32
      %59 = vector.broadcast %cst_35 : f32 to vector<8x1xf32>
      %60 = arith.divf %59, %58 : vector<8x1xf32>
      %c0_36 = arith.constant 0 : index
      %c0_37 = arith.constant 0 : index
      %61 = vector.load %arg19[%c0_36, %c0_37] : memref<8x128xf32, #tpu.memory_space<vmem>>, vector<8x128xf32>
      %62 = vector.broadcast %60 : vector<8x1xf32> to vector<8x128xf32>
      %63 = arith.mulf %61, %62 : vector<8x128xf32>
      %c0_38 = arith.constant 0 : index
      %c0_39 = arith.constant 0 : index
      %64 = vector.load %arg2[%c0_38, %c0_39] : memref<8x128xf32, #tpu.memory_space<vmem>>, vector<8x128xf32>
      %c0_40 = arith.constant 0 : index
      %c0_41 = arith.constant 0 : index
      %65 = vector.load %arg20[%c0_40, %c0_41] : memref<8x256xf32, #tpu.memory_space<vmem>>, vector<8x128xf32>
      tpu.vector_store %arg20[%c0_40, %c0_41], %64 {strides = array<i32>} : memref<8x256xf32, #tpu.memory_space<vmem>>, vector<8x128xf32>,
      %c0_42 = arith.constant 0 : index
      %c128 = arith.constant 128 : index
      %66 = vector.load %arg20[%c0_42, %c128] : memref<8x256xf32, #tpu.memory_space<vmem>>, vector<8x128xf32>
      tpu.vector_store %arg20[%c0_42, %c128], %63 {strides = array<i32>} : memref<8x256xf32, #tpu.memory_space<vmem>>, vector<8x128xf32>,
      %c0_43 = arith.constant 0 : index
      %c0_44 = arith.constant 0 : index
      %67 = vector.load %arg20[%c0_43, %c0_44] : memref<8x256xf32, #tpu.memory_space<vmem>>, vector<8x256xf32>
      %c0_45 = arith.constant 0 : index
      %c0_46 = arith.constant 0 : index
      %68 = vector.load %arg11[%c0_45, %c0_46] : memref<256x512xf32, #tpu.memory_space<vmem>>, vector<256x512xf32>
      %cst_47 = arith.constant dense<0.000000e+00> : vector<8x512xf32>
      %69 = tpu.matmul %67, %68, %cst_47 {dimension_numbers = #tpu.dot_dimension_numbers<[1], [0], [0], [1], [0, 0, 1, 1], [], []>} : vector<8x256xf32>, vector<256x512xf32>, vector<8x512xf32> -> vector<8x512xf32>
      %c0_48 = arith.constant 0 : index
      %c0_49 = arith.constant 0 : index
      %70 = vector.load %arg12[%c0_48, %c0_49] : memref<1x512xf32, #tpu.memory_space<vmem>>, vector<1x512xf32>
      %71 = vector.broadcast %70 : vector<1x512xf32> to vector<8x512xf32>
      %72 = arith.addf %69, %71 : vector<8x512xf32>
      %73 = vector.extract_strided_slice %72 {offsets = [0, 0], sizes = [8, 128], strides = [1, 1]} : vector<8x512xf32> to vector<8x128xf32>
      %74 = arith.negf %73 : vector<8x128xf32>
      %75 = math.exp %74 : vector<8x128xf32>
      %cst_50 = arith.constant 1.000000e+00 : f32
      %76 = vector.broadcast %cst_50 : f32 to vector<8x128xf32>
      %77 = arith.addf %76, %75 : vector<8x128xf32>
      %78 = arith.divf %76, %77 : vector<8x128xf32>
      %79 = vector.extract_strided_slice %72 {offsets = [0, 128], sizes = [8, 128], strides = [1, 1]} : vector<8x512xf32> to vector<8x128xf32>
      %80 = arith.negf %79 : vector<8x128xf32>
      %81 = math.exp %80 : vector<8x128xf32>
      %cst_51 = arith.constant 1.000000e+00 : f32
      %82 = vector.broadcast %cst_51 : f32 to vector<8x128xf32>
      %83 = arith.addf %82, %81 : vector<8x128xf32>
      %84 = arith.divf %82, %83 : vector<8x128xf32>
      %85 = vector.extract_strided_slice %72 {offsets = [0, 256], sizes = [8, 128], strides = [1, 1]} : vector<8x512xf32> to vector<8x128xf32>
      %86 = math.tanh %85 : vector<8x128xf32>
      %87 = vector.extract_strided_slice %72 {offsets = [0, 384], sizes = [8, 128], strides = [1, 1]} : vector<8x512xf32> to vector<8x128xf32>
      %88 = arith.negf %87 : vector<8x128xf32>
      %89 = math.exp %88 : vector<8x128xf32>
      %cst_52 = arith.constant 1.000000e+00 : f32
      %90 = vector.broadcast %cst_52 : f32 to vector<8x128xf32>
      %91 = arith.addf %90, %89 : vector<8x128xf32>
      %92 = arith.divf %90, %91 : vector<8x128xf32>
      %c0_53 = arith.constant 0 : index
      %c0_54 = arith.constant 0 : index
      %93 = vector.load %arg5[%c0_53, %c0_54] : memref<8x128xf32, #tpu.memory_space<vmem>>, vector<8x128xf32>
      %94 = arith.mulf %84, %93 : vector<8x128xf32>
      %95 = arith.mulf %78, %86 : vector<8x128xf32>
      %96 = arith.addf %94, %95 : vector<8x128xf32>
      %97 = math.tanh %96 : vector<8x128xf32>
      %98 = arith.mulf %92, %97 : vector<8x128xf32>
      %c0_55 = arith.constant 0 : index
      %c0_56 = arith.constant 0 : index
      %99 = vector.load %arg13[%c0_55, %c0_56] : memref<8x128xf32, #tpu.memory_space<vmem>>, vector<8x128xf32>
      tpu.vector_store %arg13[%c0_55, %c0_56], %98 {strides = array<i32>} : memref<8x128xf32, #tpu.memory_space<vmem>>, vector<8x128xf32>,
      %c0_57 = arith.constant 0 : index
      %c0_58 = arith.constant 0 : index
      %100 = vector.load %arg14[%c0_57, %c0_58] : memref<8x128xf32, #tpu.memory_space<vmem>>, vector<8x128xf32>
      tpu.vector_store %arg14[%c0_57, %c0_58], %96 {strides = array<i32>} : memref<8x128xf32, #tpu.memory_space<vmem>>, vector<8x128xf32>,
      %c0_59 = arith.constant 0 : index
      %c0_60 = arith.constant 0 : index
      %101 = vector.load %arg15[%c0_59, %c0_60] : memref<8x8xf32, #tpu.memory_space<vmem>>, vector<8x8xf32>
      %c0_61 = arith.constant 0 : index
      %c0_62 = arith.constant 0 : index
      %102 = vector.load %arg17[%c0_61, %c0_62] : memref<8x1xf32, #tpu.memory_space<vmem>>, vector<8x1xf32>
      %103 = vector.broadcast %102 : vector<8x1xf32> to vector<8x8xf32>
      %104 = arith.subf %101, %103 : vector<8x8xf32>
      %105 = math.exp %104 : vector<8x8xf32>
      %106 = vector.broadcast %60 : vector<8x1xf32> to vector<8x8xf32>
      %107 = arith.mulf %105, %106 : vector<8x8xf32>
      %c0_63 = arith.constant 0 : index
      %c0_64 = arith.constant 0 : index
      %108 = vector.load %arg15[%c0_63, %c0_64] : memref<8x8xf32, #tpu.memory_space<vmem>>, vector<8x8xf32>
      tpu.vector_store %arg15[%c0_63, %c0_64], %107 {strides = array<i32>} : memref<8x8xf32, #tpu.memory_space<vmem>>, vector<8x8xf32>,
    } else {
    }
    return
  }
  func.func @transform_0(%arg0: i32, %arg1: i32) -> (i32, i32) {
    %c0_i32 = arith.constant 0 : i32
    %c0_i32_0 = arith.constant 0 : i32
    return %arg0, %c0_i32 : i32, i32
  }
  func.func @transform_1(%arg0: i32, %arg1: i32) -> (i32, i32, i32) {
    %c0_i32 = arith.constant 0 : i32
    %c0_i32_0 = arith.constant 0 : i32
    return %arg0, %arg1, %c0_i32 : i32, i32, i32
  }
  func.func @transform_2(%arg0: i32, %arg1: i32) -> (i32, i32) {
    %c0_i32 = arith.constant 0 : i32
    %c0_i32_0 = arith.constant 0 : i32
    return %arg0, %c0_i32 : i32, i32
  }
  func.func @transform_3(%arg0: i32, %arg1: i32) -> (i32, i32) {
    %c0_i32 = arith.constant 0 : i32
    %c0_i32_0 = arith.constant 0 : i32
    return %arg0, %c0_i32 : i32, i32
  }
  func.func @transform_4(%arg0: i32, %arg1: i32) -> (i32, i32) {
    %c0_i32 = arith.constant 0 : i32
    %c0_i32_0 = arith.constant 0 : i32
    %c0_i32_1 = arith.constant 0 : i32
    return %c0_i32, %c0_i32_0 : i32, i32
  }
  func.func @transform_5(%arg0: i32, %arg1: i32) -> (i32, i32) {
    %c0_i32 = arith.constant 0 : i32
    %c0_i32_0 = arith.constant 0 : i32
    %c0_i32_1 = arith.constant 0 : i32
    return %c0_i32, %c0_i32_0 : i32, i32
  }
  func.func @transform_6(%arg0: i32, %arg1: i32) -> (i32, i32) {
    %c0_i32 = arith.constant 0 : i32
    %c0_i32_0 = arith.constant 0 : i32
    %c0_i32_1 = arith.constant 0 : i32
    return %c0_i32, %c0_i32_0 : i32, i32
  }
  func.func @transform_7(%arg0: i32, %arg1: i32) -> (i32, i32) {
    %c0_i32 = arith.constant 0 : i32
    %c0_i32_0 = arith.constant 0 : i32
    %c0_i32_1 = arith.constant 0 : i32
    return %c0_i32, %c0_i32_0 : i32, i32
  }
  func.func @transform_8(%arg0: i32, %arg1: i32) -> (i32, i32) {
    %c0_i32 = arith.constant 0 : i32
    %c0_i32_0 = arith.constant 0 : i32
    %c0_i32_1 = arith.constant 0 : i32
    return %c0_i32, %c0_i32_0 : i32, i32
  }
  func.func @transform_9(%arg0: i32, %arg1: i32) -> (i32, i32) {
    %c0_i32 = arith.constant 0 : i32
    %c0_i32_0 = arith.constant 0 : i32
    %c0_i32_1 = arith.constant 0 : i32
    return %c0_i32, %c0_i32_0 : i32, i32
  }
  func.func @transform_10(%arg0: i32, %arg1: i32) -> (i32, i32) {
    %c0_i32 = arith.constant 0 : i32
    %c0_i32_0 = arith.constant 0 : i32
    %c0_i32_1 = arith.constant 0 : i32
    return %c0_i32, %c0_i32_0 : i32, i32
  }
  func.func @transform_11(%arg0: i32, %arg1: i32) -> (i32, i32) {
    %c0_i32 = arith.constant 0 : i32
    %c0_i32_0 = arith.constant 0 : i32
    return %arg0, %c0_i32 : i32, i32
  }
  func.func @transform_12(%arg0: i32, %arg1: i32) -> (i32, i32) {
    %c0_i32 = arith.constant 0 : i32
    %c0_i32_0 = arith.constant 0 : i32
    return %arg0, %c0_i32 : i32, i32
  }
  func.func @transform_13(%arg0: i32, %arg1: i32) -> (i32, i32) {
    %c0_i32 = arith.constant 0 : i32
    %c0_i32_0 = arith.constant 0 : i32
    return %arg0, %c0_i32 : i32, i32
  }
}

</mosaic_0001>

<llo_original>
// kernel: lstm_attn_decoder.1
$region0: #{lstm_attn_decoder.1}
  #allocation0 [shape = 'u32[]', space=smem, size = 0x4, offset = 0x4, fixed_abs, tag = 'smem constant byte address 0x4 - core index']
  #allocation1 [shape = 'u32[144,128]{1,0:T(1,128)}', space=vmem, size = 0x12000, scoped, tag = 'internal scratch']
  #allocation2 [shape = 'f32[8,128]{1,0:T(8,128)}', space=vmem, size = 0x1000, scoped, tag = 'scratch operand']
  #allocation3 [shape = 'f32[8,1]{1,0:T(8,128)}', space=vmem, size = 0x1000, scoped, tag = 'scratch operand']
  #allocation4 [shape = 'f32[8,1]{1,0:T(8,128)}', space=vmem, size = 0x1000, scoped, tag = 'scratch operand']
  #allocation5 [shape = 'f32[8,128]{1,0:T(8,128)}', space=vmem, size = 0x1000, scoped, tag = 'scratch operand']
  #allocation6 [shape = 'f32[8,256]{1,0:T(8,128)}', space=vmem, size = 0x2000, scoped, tag = 'scratch operand']
  %s0 = inlined_call_operand.vmem [shape: f32[8,128], index: 0, kind: input, shape index: {}]
  %s1 = inlined_call_operand.vmem [shape: f32[8,8,16], index: 1, kind: input, shape index: {}]
  %s2 = inlined_call_operand.vmem [shape: f32[8,128], index: 2, kind: input, shape index: {}]
  %s3 = inlined_call_operand.vmem [shape: f32[8,128], index: 3, kind: input, shape index: {}]
  %s4 = inlined_call_operand.vmem [shape: f32[128,128], index: 4, kind: input, shape index: {}]
  %s5 = inlined_call_operand.vmem [shape: f32[1,128], index: 5, kind: input, shape index: {}]
  %s6 = inlined_call_operand.vmem [shape: f32[16,128], index: 6, kind: input, shape index: {}]
  %s7 = inlined_call_operand.vmem [shape: f32[1,128], index: 7, kind: input, shape index: {}]
  %s8 = inlined_call_operand.vmem [shape: f32[1,128], index: 8, kind: input, shape index: {}]
  %s9 = inlined_call_operand.vmem [shape: f32[256,512], index: 9, kind: input, shape index: {}]
  %s10 = inlined_call_operand.vmem [shape: f32[1,512], index: 10, kind: input, shape index: {}]
  %s11 = inlined_call_operand.vmem [shape: f32[8,128], index: 11, kind: output, shape index: {0}]
  %s12 = inlined_call_operand.vmem [shape: f32[8,128], index: 12, kind: output, shape index: {1}]
  %s13 = inlined_call_operand.vmem [shape: f32[8,8], index: 13, kind: output, shape index: {2}]
  %14 = xla_tuple %s11, %s12, %s13
  %s15 = sld [smem:[#allocation0]]
  $region78: #{lstm_attn_decoder.1} parent=0
    _
  %s17 = ssub.s32 1, %s15
  %s18 = scalar_select 0, %s17, %s15
  // Predicated region
  $region2: #{lstm_attn_decoder.1} parent=0 // pred_check
    _
  $region3: #{lstm_attn_decoder.1} parent=0 // pred_check_branch
    %20 = sbr.rel (0) target = $region5
  $region4: #{lstm_attn_decoder.1} parent=0 // pred_region
    _
  $region5: #{lstm_attn_decoder.1} parent=0 // pred_fallthru
    _
  // Predicated region
  $region6: #{lstm_attn_decoder.1} parent=0 // pred_check
    _
  $region7: #{lstm_attn_decoder.1} parent=0 // pred_check_branch
    %22 = sbr.rel (0) target = $region9
  $region8: #{lstm_attn_decoder.1} parent=0 // pred_region
    _
  $region9: #{lstm_attn_decoder.1} parent=0 // pred_fallthru
    _
  // Predicated region
  $region10: #{lstm_attn_decoder.1} parent=0 // pred_check
    _
  $region11: #{lstm_attn_decoder.1} parent=0 // pred_check_branch
    %24 = sbr.rel (0) target = $region13
  $region12: #{lstm_attn_decoder.1} parent=0 // pred_region
    _
  $region13: #{lstm_attn_decoder.1} parent=0 // pred_fallthru
    _
  // Predicated region
  $region14: #{lstm_attn_decoder.1} parent=0 // pred_check
    _
  $region15: #{lstm_attn_decoder.1} parent=0 // pred_check_branch
    %26 = sbr.rel (0) target = $region17
  $region16: #{lstm_attn_decoder.1} parent=0 // pred_region
    _
  $region17: #{lstm_attn_decoder.1} parent=0 // pred_fallthru
    _
  // Predicated region
  $region18: #{lstm_attn_decoder.1} parent=0 // pred_check
    _
  $region19: #{lstm_attn_decoder.1} parent=0 // pred_check_branch
    %28 = sbr.rel (0) target = $region21
  $region20: #{lstm_attn_decoder.1} parent=0 // pred_region
    _
  $region21: #{lstm_attn_decoder.1} parent=0 // pred_fallthru
    _
  // Predicated region
  $region22: #{lstm_attn_decoder.1} parent=0 // pred_check
    _
  $region23: #{lstm_attn_decoder.1} parent=0 // pred_check_branch
    %30 = sbr.rel (0) target = $region25
  $region24: #{lstm_attn_decoder.1} parent=0 // pred_region
    _
  $region25: #{lstm_attn_decoder.1} parent=0 // pred_fallthru
    _
  // Predicated region
  $region26: #{lstm_attn_decoder.1} parent=0 // pred_check
    _
  $region27: #{lstm_attn_decoder.1} parent=0 // pred_check_branch
    %32 = sbr.rel (0) target = $region29
  $region28: #{lstm_attn_decoder.1} parent=0 // pred_region
    _
  $region29: #{lstm_attn_decoder.1} parent=0 // pred_fallthru
    _
  // Predicated region
  $region30: #{lstm_attn_decoder.1} parent=0 // pred_check
    _
  $region31: #{lstm_attn_decoder.1} parent=0 // pred_check_branch
    %34 = sbr.rel (0) target = $region33
  $region32: #{lstm_attn_decoder.1} parent=0 // pred_region
    _
  $region33: #{lstm_attn_decoder.1} parent=0 // pred_fallthru
    _
  // Predicated region
  $region34: #{lstm_attn_decoder.1} parent=0 // pred_check
    _
  $region35: #{lstm_attn_decoder.1} parent=0 // pred_check_branch
    %36 = sbr.rel (0) target = $region37
  $region36: #{lstm_attn_decoder.1} parent=0 // pred_region
    _
  $region37: #{lstm_attn_decoder.1} parent=0 // pred_fallthru
    _
  // Predicated region
  $region38: #{lstm_attn_decoder.1} parent=0 // pred_check
    _
  $region39: #{lstm_attn_decoder.1} parent=0 // pred_check_branch
    %38 = sbr.rel (0) target = $region41
  $region40: #{lstm_attn_decoder.1} parent=0 // pred_region
    _
  $region41: #{lstm_attn_decoder.1} parent=0 // pred_fallthru
    _
  // Predicated region
  $region42: #{lstm_attn_decoder.1} parent=0 // pred_check
    _
  $region43: #{lstm_attn_decoder.1} parent=0 // pred_check_branch
    %40 = sbr.rel (0) target = $region45
  $region44: #{lstm_attn_decoder.1} parent=0 // pred_region
    _
  $region45: #{lstm_attn_decoder.1} parent=0 // pred_fallthru
    _
  %p41 = scmp.eq.s32.totalorder 0, 0
  // Predicated region
  $region46: #{lstm_attn_decoder.1} parent=0 // pred_check
    %p42 = pneg %p41
  $region47: #{lstm_attn_decoder.1} parent=0 // pred_check_branch
    %44 = sbr.rel (%p42) target = $region49
  $region48: #{lstm_attn_decoder.1} parent=0 // pred_region
    %v45 = vld [vmem:[%s2] sm:$0xff]
    %v46 = vld [vmem:[%s4] sm:$0xff]
    %v47 = vld [vmem:[%s4 + $0x8] sm:$0xff]
    %v48 = vld [vmem:[%s4 + $0x10] sm:$0xff]
    %v49 = vld [vmem:[%s4 + $0x18] sm:$0xff]
    %v50 = vld [vmem:[%s4 + $0x20] sm:$0xff]
    %v51 = vld [vmem:[%s4 + $0x28] sm:$0xff]
    %v52 = vld [vmem:[%s4 + $0x30] sm:$0xff]
    %v53 = vld [vmem:[%s4 + $0x38] sm:$0xff]
    %v54 = vld [vmem:[%s4 + $0x40] sm:$0xff]
    %v55 = vld [vmem:[%s4 + $0x48] sm:$0xff]
    %v56 = vld [vmem:[%s4 + $0x50] sm:$0xff]
    %v57 = vld [vmem:[%s4 + $0x58] sm:$0xff]
    %v58 = vld [vmem:[%s4 + $0x60] sm:$0xff]
    %v59 = vld [vmem:[%s4 + $0x68] sm:$0xff]
    %v60 = vld [vmem:[%s4 + $0x70] sm:$0xff]
    %v61 = vld [vmem:[%s4 + $0x78] sm:$0xff]
    %v62 = vld [vmem:[%s5] sm:$0x1]
    %v64 = vlaneseq
    %v65 = vshrl.u32 %v64, 7
    %v66 = vsub.s32 0, %v65
    %v67 = vrot.slane %v62, %v66
    %69 = vmatprep.subr.mxu0 0.0
    %70 = vmatpush1.msra.mxu0 %v46
    %71 = vmatprep.subr.mxu0 0.0
    %72 = vmatpush1.msra.mxu0 %v47
    %73 = vmatprep.subr.mxu0 0.0
    %74 = vmatpush1.msra.mxu0 %v48
    %75 = vmatprep.subr.mxu0 0.0
    %76 = vmatpush1.msra.mxu0 %v49
    %77 = vmatprep.subr.mxu0 0.0
    %78 = vmatpush1.msra.mxu0 %v50
    %79 = vmatprep.subr.mxu0 0.0
    %80 = vmatpush1.msra.mxu0 %v51
    %81 = vmatprep.subr.mxu0 0.0
    %82 = vmatpush1.msra.mxu0 %v52
    %83 = vmatprep.subr.mxu0 0.0
    %84 = vmatpush1.msra.mxu0 %v53
    %85 = vmatprep.subr.mxu0 0.0
    %86 = vmatpush1.msra.mxu0 %v54
    %87 = vmatprep.subr.mxu0 0.0
    %88 = vmatpush1.msra.mxu0 %v55
    %89 = vmatprep.subr.mxu0 0.0
    %90 = vmatpush1.msra.mxu0 %v56
    %91 = vmatprep.subr.mxu0 0.0
    %92 = vmatpush1.msra.mxu0 %v57
    %93 = vmatprep.subr.mxu0 0.0
    %94 = vmatpush1.msra.mxu0 %v58
    %95 = vmatprep.subr.mxu0 0.0
    %96 = vmatpush1.msra.mxu0 %v59
    %97 = vmatprep.subr.mxu0 0.0
    %98 = vmatpush1.msra.mxu0 %v60
    %99 = vmatprep.subr.mxu0 0.0
    %100 = vmatpush1.msra.mxu0 %v61
    %101 = vmatprep.subr.mxu0 0.0
    %102 = vmatpush1.msra.mxu0 0.0
    %103 = vmatprep.subr.mxu0 0.0
    %104 = vmatpush1.msra.mxu0 0.0
    %105 = vmatprep.subr.mxu0 0.0
    %106 = vmatpush1.msra.mxu0 0.0
    %107 = vmatprep.subr.mxu0 0.0
    %108 = vmatpush1.msra.mxu0 0.0
    %109 = vmatprep.subr.mxu0 0.0
    %110 = vmatpush1.msra.mxu0 0.0
    %111 = vmatprep.subr.mxu0 0.0
    %112 = vmatpush1.msra.mxu0 0.0
    %113 = vmatprep.subr.mxu0 0.0
    %114 = vmatpush1.msra.mxu0 0.0
    %115 = vmatprep.subr.mxu0 0.0
    %116 = vmatpush1.msra.mxu0 0.0
    %117 = vmatprep.subr.mxu0 0.0
    %118 = vmatpush1.msra.mxu0 0.0
    %119 = vmatprep.subr.mxu0 0.0
    %120 = vmatpush1.msra.mxu0 0.0
    %121 = vmatprep.subr.mxu0 0.0
    %122 = vmatpush1.msra.mxu0 0.0
    %123 = vmatprep.subr.mxu0 0.0
    %124 = vmatpush1.msra.mxu0 0.0
    %125 = vmatprep.subr.mxu0 0.0
    %126 = vmatpush1.msra.mxu0 0.0
    %127 = vmatprep.subr.mxu0 0.0
    %128 = vmatpush1.msra.mxu0 0.0
    %129 = vmatprep.subr.mxu0 0.0
    %130 = vmatpush1.msra.mxu0 0.0
    %131 = vmatprep.subr.mxu0 0.0
    %132 = vmatpush1.msra.mxu0 0.0
    %133 = vmatprep.mubr.f32.mxu0 0.0
    %134 = vmatmul.mubr.f32.gmra.mrb[0].mxu0 %v45
    %v135 = vpop.f32.mrb[0].mxu0
    %v136 = vadd.f32 %v67, %v135
    %v137 = vpop.f32.mrb[0].mxu0
    %138 = vdwg.mxu0
    %139 = vst [vmem:[#allocation2] sm:$0xff] %v136
    %vm140 = vcmask 7168
    %141 = vst.msk [vmem:[#allocation3] sm:$0xff] %vm140, -inf
    %142 = vst.msk [vmem:[#allocation4] sm:$0xff] %vm140, 0.0
    %143 = vst [vmem:[#allocation5] sm:$0xff] 0.0
  $region49: #{lstm_attn_decoder.1} parent=0 // pred_fallthru
    _
  %v144 = vld [vmem:[%s1] sm:$0xff]
  %v145 = vld [vmem:[%s1 + $0x8] sm:$0xff]
  %v146 = vld [vmem:[%s1 + $0x10] sm:$0xff]
  %v147 = vld [vmem:[%s1 + $0x18] sm:$0xff]
  %v148 = vld [vmem:[%s1 + $0x20] sm:$0xff]
  %v149 = vld [vmem:[%s1 + $0x28] sm:$0xff]
  %v150 = vld [vmem:[%s1 + $0x30] sm:$0xff]
  %v151 = vld [vmem:[%s1 + $0x38] sm:$0xff]
  %v152 = vld [vmem:[%s6] sm:$0xff]
  %v153 = vld [vmem:[%s6 + $0x8] sm:$0xff]
  %v154 = vld [vmem:[%s7] sm:$0x1]
  %v156 = vlaneseq
  %v157 = vshrl.u32 %v156, 7
  %v158 = vsub.s32 0, %v157
  %v159 = vrot.slane %v154, %v158
  %vm161 = vcmask 130048
  %v163 = vsel %vm161, %v144, 0
  %v166 = vsel %vm161, %v145, 0
  %v169 = vsel %vm161, %v146, 0
  %v172 = vsel %vm161, %v147, 0
  %v175 = vsel %vm161, %v148, 0
  %v178 = vsel %vm161, %v149, 0
  %v181 = vsel %vm161, %v150, 0
  %v184 = vsel %vm161, %v151, 0
  %186 = vmatprep.subr.mxu0 0.0
  %187 = vmatpush1.msra.mxu0 %v152
  %188 = vmatprep.subr.mxu0 0.0
  %189 = vmatpush1.msra.mxu0 %v153
  %190 = vmatprep.subr.mxu0 0.0
  %191 = vmatpush1.msra.mxu0 0.0
  %192 = vmatprep.subr.mxu0 0.0
  %193 = vmatpush1.msra.mxu0 0.0
  %194 = vmatprep.subr.mxu0 0.0
  %195 = vmatpush1.msra.mxu0 0.0
  %196 = vmatprep.subr.mxu0 0.0
  %197 = vmatpush1.msra.mxu0 0.0
  %198 = vmatprep.subr.mxu0 0.0
  %199 = vmatpush1.msra.mxu0 0.0
  %200 = vmatprep.subr.mxu0 0.0
  %201 = vmatpush1.msra.mxu0 0.0
  %202 = vmatprep.subr.mxu0 0.0
  %203 = vmatpush1.msra.mxu0 0.0
  %204 = vmatprep.subr.mxu0 0.0
  %205 = vmatpush1.msra.mxu0 0.0
  %206 = vmatprep.subr.mxu0 0.0
  %207 = vmatpush1.msra.mxu0 0.0
  %208 = vmatprep.subr.mxu0 0.0
  %209 = vmatpush1.msra.mxu0 0.0
  %210 = vmatprep.subr.mxu0 0.0
  %211 = vmatpush1.msra.mxu0 0.0
  %212 = vmatprep.subr.mxu0 0.0
  %213 = vmatpush1.msra.mxu0 0.0
  %214 = vmatprep.subr.mxu0 0.0
  %215 = vmatpush1.msra.mxu0 0.0
  %216 = vmatprep.subr.mxu0 0.0
  %217 = vmatpush1.msra.mxu0 0.0
  %218 = vmatprep.subr.mxu0 0.0
  %219 = vmatpush1.msra.mxu0 0.0
  %220 = vmatprep.subr.mxu0 0.0
  %221 = vmatpush1.msra.mxu0 0.0
  %222 = vmatprep.subr.mxu0 0.0
  %223 = vmatpush1.msra.mxu0 0.0
  %224 = vmatprep.subr.mxu0 0.0
  %225 = vmatpush1.msra.mxu0 0.0
  %226 = vmatprep.subr.mxu0 0.0
  %227 = vmatpush1.msra.mxu0 0.0
  %228 = vmatprep.subr.mxu0 0.0
  %229 = vmatpush1.msra.mxu0 0.0
  %230 = vmatprep.subr.mxu0 0.0
  %231 = vmatpush1.msra.mxu0 0.0
  %232 = vmatprep.subr.mxu0 0.0
  %233 = vmatpush1.msra.mxu0 0.0
  %234 = vmatprep.subr.mxu0 0.0
  %235 = vmatpush1.msra.mxu0 0.0
  %236 = vmatprep.subr.mxu0 0.0
  %237 = vmatpush1.msra.mxu0 0.0
  %238 = vmatprep.subr.mxu0 0.0
  %239 = vmatpush1.msra.mxu0 0.0
  %240 = vmatprep.subr.mxu0 0.0
  %241 = vmatpush1.msra.mxu0 0.0
  %242 = vmatprep.subr.mxu0 0.0
  %243 = vmatpush1.msra.mxu0 0.0
  %244 = vmatprep.subr.mxu0 0.0
  %245 = vmatpush1.msra.mxu0 0.0
  %246 = vmatprep.subr.mxu0 0.0
  %247 = vmatpush1.msra.mxu0 0.0
  %248 = vmatprep.subr.mxu0 0.0
  %249 = vmatpush1.msra.mxu0 0.0
  %250 = vmatprep.mubr.f32.mxu0 0.0
  %251 = vmatmul.mubr.f32.gmra.mrb[0].mxu0 %v163
  %v252 = vpop.f32.mrb[0].mxu0
  %v253 = vadd.f32 %v159, %v252
  %v254 = vpop.f32.mrb[0].mxu0
  %255 = vmatprep.mubr.f32.mxu0 0.0
  %256 = vmatmul.mubr.f32.gmra.mrb[0].mxu0 %v166
  %v257 = vpop.f32.mrb[0].mxu0
  %v258 = vadd.f32 %v159, %v257
  %v259 = vpop.f32.mrb[0].mxu0
  %260 = vmatprep.mubr.f32.mxu0 0.0
  %261 = vmatmul.mubr.f32.gmra.mrb[0].mxu0 %v169
  %v262 = vpop.f32.mrb[0].mxu0
  %v263 = vadd.f32 %v159, %v262
  %v264 = vpop.f32.mrb[0].mxu0
  %265 = vmatprep.mubr.f32.mxu0 0.0
  %266 = vmatmul.mubr.f32.gmra.mrb[0].mxu0 %v172
  %v267 = vpop.f32.mrb[0].mxu0
  %v268 = vadd.f32 %v159, %v267
  %v269 = vpop.f32.mrb[0].mxu0
  %270 = vmatprep.mubr.f32.mxu0 0.0
  %271 = vmatmul.mubr.f32.gmra.mrb[0].mxu0 %v175
  %v272 = vpop.f32.mrb[0].mxu0
  %v273 = vadd.f32 %v159, %v272
  %v274 = vpop.f32.mrb[0].mxu0
  %275 = vmatprep.mubr.f32.mxu0 0.0
  %276 = vmatmul.mubr.f32.gmra.mrb[0].mxu0 %v178
  %v277 = vpop.f32.mrb[0].mxu0
  %v278 = vadd.f32 %v159, %v277
  %v279 = vpop.f32.mrb[0].mxu0
  %280 = vmatprep.mubr.f32.mxu0 0.0
  %281 = vmatmul.mubr.f32.gmra.mrb[0].mxu0 %v181
  %v282 = vpop.f32.mrb[0].mxu0
  %v283 = vadd.f32 %v159, %v282
  %v284 = vpop.f32.mrb[0].mxu0
  %285 = vmatprep.mubr.f32.mxu0 0.0
  %286 = vmatmul.mubr.f32.gmra.mrb[0].mxu0 %v184
  %v287 = vpop.f32.mrb[0].mxu0
  %v288 = vadd.f32 %v159, %v287
  %v289 = vpop.f32.mrb[0].mxu0
  %290 = vdwg.mxu0
  %v291 = vld [vmem:[#allocation2] sm:$0xff]
  %v293 = vcombine.high %v291, %v291
  %v295 = vunpack.c.l.s4 1966171168
  %v296 = vunpack.c.0.s8 %v295
  %v297 = vlaneseq
  %v298 = vshrl.u32 %v297, 7
  %v299 = vsub.s32 %v296, %v298
  %v300 = vrot.slane %v291, %v299
  %v302 = vunpack.c.l.s4 1966171168
  %v303 = vunpack.c.0.s8 %v302
  %v304 = vlaneseq
  %v305 = vshrl.u32 %v304, 7
  %v306 = vsub.s32 %v303, %v305
  %v307 = vrot.slane %v293, %v306
  %v308 = vcombine.high %v300, %v300
  %v309 = vcombine.high %v307, %v307
  %v311 = vunpack.c.l.s4 1966171168
  %v312 = vunpack.c.0.s8 %v311
  %v313 = vlaneseq
  %v314 = vshrl.u32 %v313, 7
  %v315 = vsub.s32 %v312, %v314
  %v316 = vrot.slane %v300, %v315
  %v318 = vunpack.c.l.s4 1966171168
  %v319 = vunpack.c.0.s8 %v318
  %v320 = vlaneseq
  %v321 = vshrl.u32 %v320, 7
  %v322 = vsub.s32 %v319, %v321
  %v323 = vrot.slane %v307, %v322
  %v325 = vunpack.c.l.s4 1966171168
  %v326 = vunpack.c.0.s8 %v325
  %v327 = vlaneseq
  %v328 = vshrl.u32 %v327, 7
  %v329 = vsub.s32 %v326, %v328
  %v330 = vrot.slane %v308, %v329
  %v332 = vunpack.c.l.s4 1966171168
  %v333 = vunpack.c.0.s8 %v332
  %v334 = vlaneseq
  %v335 = vshrl.u32 %v334, 7
  %v336 = vsub.s32 %v333, %v335
  %v337 = vrot.slane %v309, %v336
  %v338 = vcombine.high %v316, %v316
  %v339 = vcombine.high %v323, %v323
  %v340 = vcombine.high %v330, %v330
  %v341 = vcombine.high %v337, %v337
  %v342 = vlaneseq
  %v343 = vshrl.u32 %v342, 7
  %v344 = vsub.s32 0, %v343
  %v345 = vrot.slane %v316, %v344
  %v346 = vlaneseq
  %v347 = vshrl.u32 %v346, 7
  %v348 = vsub.s32 0, %v347
  %v349 = vrot.slane %v330, %v348
  %v350 = vlaneseq
  %v351 = vshrl.u32 %v350, 7
  %v352 = vsub.s32 0, %v351
  %v353 = vrot.slane %v338, %v352
  %v354 = vlaneseq
  %v355 = vshrl.u32 %v354, 7
  %v356 = vsub.s32 0, %v355
  %v357 = vrot.slane %v340, %v356
  %v358 = vlaneseq
  %v359 = vshrl.u32 %v358, 7
  %v360 = vsub.s32 0, %v359
  %v361 = vrot.slane %v323, %v360
  %v362 = vlaneseq
  %v363 = vshrl.u32 %v362, 7
  %v364 = vsub.s32 0, %v363
  %v365 = vrot.slane %v337, %v364
  %v366 = vlaneseq
  %v367 = vshrl.u32 %v366, 7
  %v368 = vsub.s32 0, %v367
  %v369 = vrot.slane %v339, %v368
  %v370 = vlaneseq
  %v371 = vshrl.u32 %v370, 7
  %v372 = vsub.s32 0, %v371
  %v373 = vrot.slane %v341, %v372
  %v382 = vadd.f32 %v345, %v253
  %v383 = vadd.f32 %v349, %v258
  %v384 = vadd.f32 %v353, %v263
  %v385 = vadd.f32 %v357, %v268
  %v386 = vadd.f32 %v361, %v273
  %v387 = vadd.f32 %v365, %v278
  %v388 = vadd.f32 %v369, %v283
  %v389 = vadd.f32 %v373, %v288
  %v390 = vtanh.pop %v382
  %v391 = vtanh.pop %v383
  %v392 = vtanh.pop %v384
  %v393 = vtanh.pop %v385
  %v394 = vtanh.pop %v386
  %v395 = vtanh.pop %v387
  %v396 = vtanh.pop %v388
  %v397 = vtanh.pop %v389
  %v398 = vld [vmem:[%s8] sm:$0x1]
  %v400 = vlaneseq
  %v401 = vshrl.u32 %v400, 7
  %v402 = vsub.s32 0, %v401
  %v403 = vrot.slane %v398, %v402
  %v405 = vmul.f32 %v390, %v403
  %v406 = vmul.f32 %v391, %v403
  %v407 = vmul.f32 %v392, %v403
  %v408 = vmul.f32 %v393, %v403
  %v409 = vmul.f32 %v394, %v403
  %v410 = vmul.f32 %v395, %v403
  %v411 = vmul.f32 %v396, %v403
  %v412 = vmul.f32 %v397, %v403
  %413 = vadd.xlane.f32.xlu0 %v405
  %v414 = vpop.xlane.xlu0 %413
  %415 = vadd.xlane.f32.xlu0 %v406
  %v416 = vpop.xlane.xlu0 %415
  %417 = vadd.xlane.f32.xlu0 %v407
  %v418 = vpop.xlane.xlu0 %417
  %419 = vadd.xlane.f32.xlu0 %v408
  %v420 = vpop.xlane.xlu0 %419
  %421 = vadd.xlane.f32.xlu0 %v409
  %v422 = vpop.xlane.xlu0 %421
  %423 = vadd.xlane.f32.xlu0 %v410
  %v424 = vpop.xlane.xlu0 %423
  %425 = vadd.xlane.f32.xlu0 %v411
  %v426 = vpop.xlane.xlu0 %425
  %427 = vadd.xlane.f32.xlu0 %v412
  %v428 = vpop.xlane.xlu0 %427
  %s429 = smul.u32 0, 8
  %v430 = vlaneseq
  %v431 = vand.u32 %v430, 127
  %v432 = vstv %s429
  %v433 = vadd.s32 %v432, %v431
  %vm434 = vcmp.lt.s32.totalorder %v433, 8
  %v443 = vlaneseq
  %v444 = vshrl.u32 %v443, 7
  %v445 = vsub.s32 %v431, %v444
  %v446 = vrot.slane %v414, %v445
  %v447 = vlaneseq
  %v448 = vshrl.u32 %v447, 7
  %v449 = vsub.s32 %v431, %v448
  %v450 = vrot.slane %v416, %v449
  %v451 = vlaneseq
  %v452 = vshrl.u32 %v451, 7
  %v453 = vsub.s32 %v431, %v452
  %v454 = vrot.slane %v418, %v453
  %v455 = vlaneseq
  %v456 = vshrl.u32 %v455, 7
  %v457 = vsub.s32 %v431, %v456
  %v458 = vrot.slane %v420, %v457
  %v459 = vlaneseq
  %v460 = vshrl.u32 %v459, 7
  %v461 = vsub.s32 %v431, %v460
  %v462 = vrot.slane %v422, %v461
  %v463 = vlaneseq
  %v464 = vshrl.u32 %v463, 7
  %v465 = vsub.s32 %v431, %v464
  %v466 = vrot.slane %v424, %v465
  %v467 = vlaneseq
  %v468 = vshrl.u32 %v467, 7
  %v469 = vsub.s32 %v431, %v468
  %v470 = vrot.slane %v426, %v469
  %v471 = vlaneseq
  %v472 = vshrl.u32 %v471, 7
  %v473 = vsub.s32 %v431, %v472
  %v474 = vrot.slane %v428, %v473
  %vm475 = vcmask 1041409
  %v476 = vsel %vm475, %v450, %v446
  %vm477 = vcmask 1042434
  %v478 = vsel %vm477, %v454, %v476
  %vm479 = vcmask 1043459
  %v480 = vsel %vm479, %v458, %v478
  %vm481 = vcmask 1044484
  %v482 = vsel %vm481, %v462, %v480
  %vm483 = vcmask 1045509
  %v484 = vsel %vm483, %v466, %v482
  %vm485 = vcmask 1046534
  %v486 = vsel %vm485, %v470, %v484
  %vm487 = vcmask 1047559
  %v488 = vsel %vm487, %v474, %v486
  %v490 = vsel %vm434, %v488, -inf
  %vm491 = vcmask 64512
  %492 = vst.msk [vmem:[%s13] sm:$0xff] %vm491, %v490
  %v493 = vld [vmem:[#allocation3] sm:$0xff]
  %v494 = vsel %vm491, %v490, -inf
  %495 = vmax.xlane.f32.xlu0 %v494
  %v496 = vpop.xlane.xlu0 %495
  %v497 = vmax.f32 %v493, %v496
  %v498 = vsub.f32 %v493, %v497
  %v499 = vmul.f32 %v498, 1.442695
  %v500 = vpow.pop %v499
  %502 = vset.pattern.permute.xlu0 0
  %503 = vperm.xlu0 %502, %v497
  %v504 = vpop.permute.xlu0 %503
  %v506 = vsub.f32 %v490, %v504
  %v507 = vmul.f32 %v506, 1.442695
  %v508 = vpow.pop %v507
  %v509 = vld [vmem:[#allocation4] sm:$0xff]
  %v510 = vmul.f32 %v500, %v509
  %v511 = vsel %vm491, %v508, 0.0
  %512 = vadd.xlane.f32.xlu0 %v511
  %v513 = vpop.xlane.xlu0 %512
  %v514 = vadd.f32 %v510, %v513
  %vm515 = vcmask 7168
  %516 = vst.msk [vmem:[#allocation4] sm:$0xff] %vm515, %v514
  %v517 = vld [vmem:[#allocation5] sm:$0xff]
  %519 = vset.pattern.permute.xlu0 0
  %520 = vperm.xlu0 %519, %v500
  %v521 = vpop.permute.xlu0 %520
  %v523 = vmul.f32 %v521, %v517
  %v524 = vlaneseq
  %v525 = vshrl.u32 %v524, 7
  %v526 = vsub.s32 0, %v525
  %v527 = vrot.slane %v508, %v526
  %529 = vbcast.lane.b32.xlu0 %v527, 256
  %v530 = vpop.permute.xlu0 %529
  %v531 = vlaneseq
  %v532 = vshrl.u32 %v531, 7
  %v533 = vsub.s32 1, %v532
  %v534 = vrot.slane %v508, %v533
  %536 = vbcast.lane.b32.xlu0 %v534, 256
  %v537 = vpop.permute.xlu0 %536
  %v538 = vlaneseq
  %v539 = vshrl.u32 %v538, 7
  %v540 = vsub.s32 2, %v539
  %v541 = vrot.slane %v508, %v540
  %543 = vbcast.lane.b32.xlu0 %v541, 256
  %v544 = vpop.permute.xlu0 %543
  %v545 = vlaneseq
  %v546 = vshrl.u32 %v545, 7
  %v547 = vsub.s32 3, %v546
  %v548 = vrot.slane %v508, %v547
  %550 = vbcast.lane.b32.xlu0 %v548, 256
  %v551 = vpop.permute.xlu0 %550
  %v552 = vlaneseq
  %v553 = vshrl.u32 %v552, 7
  %v554 = vsub.s32 4, %v553
  %v555 = vrot.slane %v508, %v554
  %557 = vbcast.lane.b32.xlu0 %v555, 256
  %v558 = vpop.permute.xlu0 %557
  %v559 = vlaneseq
  %v560 = vshrl.u32 %v559, 7
  %v561 = vsub.s32 5, %v560
  %v562 = vrot.slane %v508, %v561
  %564 = vbcast.lane.b32.xlu0 %v562, 256
  %v565 = vpop.permute.xlu0 %564
  %v566 = vlaneseq
  %v567 = vshrl.u32 %v566, 7
  %v568 = vsub.s32 6, %v567
  %v569 = vrot.slane %v508, %v568
  %571 = vbcast.lane.b32.xlu0 %v569, 256
  %v572 = vpop.permute.xlu0 %571
  %v573 = vlaneseq
  %v574 = vshrl.u32 %v573, 7
  %v575 = vsub.s32 7, %v574
  %v576 = vrot.slane %v508, %v575
  %578 = vbcast.lane.b32.xlu0 %v576, 256
  %v579 = vpop.permute.xlu0 %578
  %v580 = vmul.f32 %v530, %v253
  %v581 = vmul.f32 %v537, %v258
  %v582 = vmul.f32 %v544, %v263
  %v583 = vmul.f32 %v551, %v268
  %v584 = vmul.f32 %v558, %v273
  %v585 = vmul.f32 %v565, %v278
  %v586 = vmul.f32 %v572, %v283
  %v587 = vmul.f32 %v579, %v288
  %v588 = vrot.slane %v580, 4
  %v589 = vadd.f32 %v580, %v588
  %v590 = vrot.slane %v589, 2
  %v591 = vadd.f32 %v589, %v590
  %v592 = vrot.slane %v591, 1
  %v593 = vadd.f32 %v591, %v592
  %v594 = vrot.slane %v581, 4
  %v595 = vadd.f32 %v581, %v594
  %v596 = vrot.slane %v595, 2
  %v597 = vadd.f32 %v595, %v596
  %v598 = vrot.slane %v597, 1
  %v599 = vadd.f32 %v597, %v598
  %v600 = vrot.slane %v582, 4
  %v601 = vadd.f32 %v582, %v600
  %v602 = vrot.slane %v601, 2
  %v603 = vadd.f32 %v601, %v602
  %v604 = vrot.slane %v603, 1
  %v605 = vadd.f32 %v603, %v604
  %v606 = vrot.slane %v583, 4
  %v607 = vadd.f32 %v583, %v606
  %v608 = vrot.slane %v607, 2
  %v609 = vadd.f32 %v607, %v608
  %v610 = vrot.slane %v609, 1
  %v611 = vadd.f32 %v609, %v610
  %v612 = vrot.slane %v584, 4
  %v613 = vadd.f32 %v584, %v612
  %v614 = vrot.slane %v613, 2
  %v615 = vadd.f32 %v613, %v614
  %v616 = vrot.slane %v615, 1
  %v617 = vadd.f32 %v615, %v616
  %v618 = vrot.slane %v585, 4
  %v619 = vadd.f32 %v585, %v618
  %v620 = vrot.slane %v619, 2
  %v621 = vadd.f32 %v619, %v620
  %v622 = vrot.slane %v621, 1
  %v623 = vadd.f32 %v621, %v622
  %v624 = vrot.slane %v586, 4
  %v625 = vadd.f32 %v586, %v624
  %v626 = vrot.slane %v625, 2
  %v627 = vadd.f32 %v625, %v626
  %v628 = vrot.slane %v627, 1
  %v629 = vadd.f32 %v627, %v628
  %v630 = vrot.slane %v587, 4
  %v631 = vadd.f32 %v587, %v630
  %v632 = vrot.slane %v631, 2
  %v633 = vadd.f32 %v631, %v632
  %v634 = vrot.slane %v633, 1
  %v635 = vadd.f32 %v633, %v634
  %v644 = vsel %vm475, %v599, %v593
  %v645 = vsel %vm477, %v605, %v644
  %v646 = vsel %vm479, %v611, %v645
  %v647 = vsel %vm481, %v617, %v646
  %v648 = vsel %vm483, %v623, %v647
  %v649 = vsel %vm485, %v629, %v648
  %v650 = vsel %vm487, %v635, %v649
  %v652 = vadd.f32 %v523, %v650
  %653 = vst [vmem:[#allocation5] sm:$0xff] %v652
  %654 = vst.msk [vmem:[#allocation3] sm:$0xff] %vm515, %v497
  // Predicated region
  $region50: #{lstm_attn_decoder.1} parent=0 // pred_check
    %p655 = pneg %p41
  $region51: #{lstm_attn_decoder.1} parent=0 // pred_check_branch
    %657 = sbr.rel (%p655) target = $region53
  $region52: #{lstm_attn_decoder.1} parent=0 // pred_region
    %v658 = vld [vmem:[#allocation4] sm:$0xff]
    %v659 = vrcp.pop %v658
    %v660 = vmul.f32 1.0, %v659
    %v661 = vld [vmem:[#allocation5] sm:$0xff]
    %663 = vset.pattern.permute.xlu0 0
    %664 = vperm.xlu0 %663, %v660
    %v665 = vpop.permute.xlu0 %664
    %v667 = vmul.f32 %v661, %v665
    %v668 = vld [vmem:[%s0] sm:$0xff]
    %669 = vst [vmem:[#allocation6] sm:$0xff] %v668
    %670 = vst [vmem:[#allocation6 + $0x8] sm:$0xff] %v667
    %v671 = vld [vmem:[#allocation6] sm:$0xff]
    %v672 = vld [vmem:[#allocation6 + $0x8] sm:$0xff]
    %v673 = vld [vmem:[%s9] sm:$0xff]
    %v674 = vld [vmem:[%s9 + $0x8] sm:$0xff]
    %v675 = vld [vmem:[%s9 + $0x10] sm:$0xff]
    %v676 = vld [vmem:[%s9 + $0x18] sm:$0xff]
    %v677 = vld [vmem:[%s9 + $0x20] sm:$0xff]
    %v678 = vld [vmem:[%s9 + $0x28] sm:$0xff]
    %v679 = vld [vmem:[%s9 + $0x30] sm:$0xff]
    %v680 = vld [vmem:[%s9 + $0x38] sm:$0xff]
    %v681 = vld [vmem:[%s9 + $0x40] sm:$0xff]
    %v682 = vld [vmem:[%s9 + $0x48] sm:$0xff]
    %v683 = vld [vmem:[%s9 + $0x50] sm:$0xff]
    %v684 = vld [vmem:[%s9 + $0x58] sm:$0xff]
    %v685 = vld [vmem:[%s9 + $0x60] sm:$0xff]
    %v686 = vld [vmem:[%s9 + $0x68] sm:$0xff]
    %v687 = vld [vmem:[%s9 + $0x70] sm:$0xff]
    %v688 = vld [vmem:[%s9 + $0x78] sm:$0xff]
    %v689 = vld [vmem:[%s9 + $0x80] sm:$0xff]
    %v690 = vld [vmem:[%s9 + $0x88] sm:$0xff]
    %v691 = vld [vmem:[%s9 + $0x90] sm:$0xff]
    %v692 = vld [vmem:[%s9 + $0x98] sm:$0xff]
    %v693 = vld [vmem:[%s9 + $0xa0] sm:$0xff]
    %v694 = vld [vmem:[%s9 + $0xa8] sm:$0xff]
    %v695 = vld [vmem:[%s9 + $0xb0] sm:$0xff]
    %v696 = vld [vmem:[%s9 + $0xb8] sm:$0xff]
    %v697 = vld [vmem:[%s9 + $0xc0] sm:$0xff]
    %v698 = vld [vmem:[%s9 + $0xc8] sm:$0xff]
    %v699 = vld [vmem:[%s9 + $0xd0] sm:$0xff]
    %v700 = vld [vmem:[%s9 + $0xd8] sm:$0xff]
    %v701 = vld [vmem:[%s9 + $0xe0] sm:$0xff]
    %v702 = vld [vmem:[%s9 + $0xe8] sm:$0xff]
    %v703 = vld [vmem:[%s9 + $0xf0] sm:$0xff]
    %v704 = vld [vmem:[%s9 + $0xf8] sm:$0xff]
    %v705 = vld [vmem:[%s9 + $0x100] sm:$0xff]
    %v706 = vld [vmem:[%s9 + $0x108] sm:$0xff]
    %v707 = vld [vmem:[%s9 + $0x110] sm:$0xff]
    %v708 = vld [vmem:[%s9 + $0x118] sm:$0xff]
    %v709 = vld [vmem:[%s9 + $0x120] sm:$0xff]
    %v710 = vld [vmem:[%s9 + $0x128] sm:$0xff]
    %v711 = vld [vmem:[%s9 + $0x130] sm:$0xff]
    %v712 = vld [vmem:[%s9 + $0x138] sm:$0xff]
    %v713 = vld [vmem:[%s9 + $0x140] sm:$0xff]
    %v714 = vld [vmem:[%s9 + $0x148] sm:$0xff]
    %v715 = vld [vmem:[%s9 + $0x150] sm:$0xff]
    %v716 = vld [vmem:[%s9 + $0x158] sm:$0xff]
    %v717 = vld [vmem:[%s9 + $0x160] sm:$0xff]
    %v718 = vld [vmem:[%s9 + $0x168] sm:$0xff]
    %v719 = vld [vmem:[%s9 + $0x170] sm:$0xff]
    %v720 = vld [vmem:[%s9 + $0x178] sm:$0xff]
    %v721 = vld [vmem:[%s9 + $0x180] sm:$0xff]
    %v722 = vld [vmem:[%s9 + $0x188] sm:$0xff]
    %v723 = vld [vmem:[%s9 + $0x190] sm:$0xff]
    %v724 = vld [vmem:[%s9 + $0x198] sm:$0xff]
    %v725 = vld [vmem:[%s9 + $0x1a0] sm:$0xff]
    %v726 = vld [vmem:[%s9 + $0x1a8] sm:$0xff]
    %v727 = vld [vmem:[%s9 + $0x1b0] sm:$0xff]
    %v728 = vld [vmem:[%s9 + $0x1b8] sm:$0xff]
    %v729 = vld [vmem:[%s9 + $0x1c0] sm:$0xff]
    %v730 = vld [vmem:[%s9 + $0x1c8] sm:$0xff]
    %v731 = vld [vmem:[%s9 + $0x1d0] sm:$0xff]
    %v732 = vld [vmem:[%s9 + $0x1d8] sm:$0xff]
    %v733 = vld [vmem:[%s9 + $0x1e0] sm:$0xff]
    %v734 = vld [vmem:[%s9 + $0x1e8] sm:$0xff]
    %v735 = vld [vmem:[%s9 + $0x1f0] sm:$0xff]
    %v736 = vld [vmem:[%s9 + $0x1f8] sm:$0xff]
    %v737 = vld [vmem:[%s9 + $0x200] sm:$0xff]
    %v738 = vld [vmem:[%s9 + $0x208] sm:$0xff]
    %v739 = vld [vmem:[%s9 + $0x210] sm:$0xff]
    %v740 = vld [vmem:[%s9 + $0x218] sm:$0xff]
    %v741 = vld [vmem:[%s9 + $0x220] sm:$0xff]
    %v742 = vld [vmem:[%s9 + $0x228] sm:$0xff]
    %v743 = vld [vmem:[%s9 + $0x230] sm:$0xff]
    %v744 = vld [vmem:[%s9 + $0x238] sm:$0xff]
    %v745 = vld [vmem:[%s9 + $0x240] sm:$0xff]
    %v746 = vld [vmem:[%s9 + $0x248] sm:$0xff]
    %v747 = vld [vmem:[%s9 + $0x250] sm:$0xff]
    %v748 = vld [vmem:[%s9 + $0x258] sm:$0xff]
    %v749 = vld [vmem:[%s9 + $0x260] sm:$0xff]
    %v750 = vld [vmem:[%s9 + $0x268] sm:$0xff]
    %v751 = vld [vmem:[%s9 + $0x270] sm:$0xff]
    %v752 = vld [vmem:[%s9 + $0x278] sm:$0xff]
    %v753 = vld [vmem:[%s9 + $0x280] sm:$0xff]
    %v754 = vld [vmem:[%s9 + $0x288] sm:$0xff]
    %v755 = vld [vmem:[%s9 + $0x290] sm:$0xff]
    %v756 = vld [vmem:[%s9 + $0x298] sm:$0xff]
    %v757 = vld [vmem:[%s9 + $0x2a0] sm:$0xff]
    %v758 = vld [vmem:[%s9 + $0x2a8] sm:$0xff]
    %v759 = vld [vmem:[%s9 + $0x2b0] sm:$0xff]
    %v760 = vld [vmem:[%s9 + $0x2b8] sm:$0xff]
    %v761 = vld [vmem:[%s9 + $0x2c0] sm:$0xff]
    %v762 = vld [vmem:[%s9 + $0x2c8] sm:$0xff]
    %v763 = vld [vmem:[%s9 + $0x2d0] sm:$0xff]
    %v764 = vld [vmem:[%s9 + $0x2d8] sm:$0xff]
    %v765 = vld [vmem:[%s9 + $0x2e0] sm:$0xff]
    %v766 = vld [vmem:[%s9 + $0x2e8] sm:$0xff]
    %v767 = vld [vmem:[%s9 + $0x2f0] sm:$0xff]
    %v768 = vld [vmem:[%s9 + $0x2f8] sm:$0xff]
    %v769 = vld [vmem:[%s9 + $0x300] sm:$0xff]
    %v770 = vld [vmem:[%s9 + $0x308] sm:$0xff]
    %v771 = vld [vmem:[%s9 + $0x310] sm:$0xff]
    %v772 = vld [vmem:[%s9 + $0x318] sm:$0xff]
    %v773 = vld [vmem:[%s9 + $0x320] sm:$0xff]
    %v774 = vld [vmem:[%s9 + $0x328] sm:$0xff]
    %v775 = vld [vmem:[%s9 + $0x330] sm:$0xff]
    %v776 = vld [vmem:[%s9 + $0x338] sm:$0xff]
    %v777 = vld [vmem:[%s9 + $0x340] sm:$0xff]
    %v778 = vld [vmem:[%s9 + $0x348] sm:$0xff]
    %v779 = vld [vmem:[%s9 + $0x350] sm:$0xff]
    %v780 = vld [vmem:[%s9 + $0x358] sm:$0xff]
    %v781 = vld [vmem:[%s9 + $0x360] sm:$0xff]
    %v782 = vld [vmem:[%s9 + $0x368] sm:$0xff]
    %v783 = vld [vmem:[%s9 + $0x370] sm:$0xff]
    %v784 = vld [vmem:[%s9 + $0x378] sm:$0xff]
    %v785 = vld [vmem:[%s9 + $0x380] sm:$0xff]
    %v786 = vld [vmem:[%s9 + $0x388] sm:$0xff]
    %v787 = vld [vmem:[%s9 + $0x390] sm:$0xff]
    %v788 = vld [vmem:[%s9 + $0x398] sm:$0xff]
    %v789 = vld [vmem:[%s9 + $0x3a0] sm:$0xff]
    %v790 = vld [vmem:[%s9 + $0x3a8] sm:$0xff]
    %v791 = vld [vmem:[%s9 + $0x3b0] sm:$0xff]
    %v792 = vld [vmem:[%s9 + $0x3b8] sm:$0xff]
    %v793 = vld [vmem:[%s9 + $0x3c0] sm:$0xff]
    %v794 = vld [vmem:[%s9 + $0x3c8] sm:$0xff]
    %v795 = vld [vmem:[%s9 + $0x3d0] sm:$0xff]
    %v796 = vld [vmem:[%s9 + $0x3d8] sm:$0xff]
    %v797 = vld [vmem:[%s9 + $0x3e0] sm:$0xff]
    %v798 = vld [vmem:[%s9 + $0x3e8] sm:$0xff]
    %v799 = vld [vmem:[%s9 + $0x3f0] sm:$0xff]
    %v800 = vld [vmem:[%s9 + $0x3f8] sm:$0xff]
    %v801 = vld [vmem:[%s10] sm:$0xf]
    %v803 = vlaneseq
    %v804 = vshrl.u32 %v803, 7
    %v805 = vsub.s32 0, %v804
    %v806 = vrot.slane %v801, %v805
    %v807 = vlaneseq
    %v808 = vshrl.u32 %v807, 7
    %v809 = vsub.s32 1, %v808
    %v810 = vrot.slane %v801, %v809
    %v811 = vlaneseq
    %v812 = vshrl.u32 %v811, 7
    %v813 = vsub.s32 2, %v812
    %v814 = vrot.slane %v801, %v813
    %v815 = vlaneseq
    %v816 = vshrl.u32 %v815, 7
    %v817 = vsub.s32 3, %v816
    %v818 = vrot.slane %v801, %v817
    %823 = vmatprep.subr.mxu0 %v674
    %824 = vmatpush1.msra.mxu0 %v673
    %825 = vmatprep.subr.mxu0 %v678
    %826 = vmatpush1.msra.mxu0 %v677
    %827 = vmatprep.subr.mxu0 %v682
    %828 = vmatpush1.msra.mxu0 %v681
    %829 = vmatprep.subr.mxu0 %v686
    %830 = vmatpush1.msra.mxu0 %v685
    %831 = vmatprep.subr.mxu0 %v690
    %832 = vmatpush1.msra.mxu0 %v689
    %833 = vmatprep.subr.mxu0 %v694
    %834 = vmatpush1.msra.mxu0 %v693
    %835 = vmatprep.subr.mxu0 %v698
    %836 = vmatpush1.msra.mxu0 %v697
    %837 = vmatprep.subr.mxu0 %v702
    %838 = vmatpush1.msra.mxu0 %v701
    %839 = vmatprep.subr.mxu0 %v706
    %840 = vmatpush1.msra.mxu0 %v705
    %841 = vmatprep.subr.mxu0 %v710
    %842 = vmatpush1.msra.mxu0 %v709
    %843 = vmatprep.subr.mxu0 %v714
    %844 = vmatpush1.msra.mxu0 %v713
    %845 = vmatprep.subr.mxu0 %v718
    %846 = vmatpush1.msra.mxu0 %v717
    %847 = vmatprep.subr.mxu0 %v722
    %848 = vmatpush1.msra.mxu0 %v721
    %849 = vmatprep.subr.mxu0 %v726
    %850 = vmatpush1.msra.mxu0 %v725
    %851 = vmatprep.subr.mxu0 %v730
    %852 = vmatpush1.msra.mxu0 %v729
    %853 = vmatprep.subr.mxu0 %v734
    %854 = vmatpush1.msra.mxu0 %v733
    %855 = vmatprep.subr.mxu0 %v738
    %856 = vmatpush1.msra.mxu0 %v737
    %857 = vmatprep.subr.mxu0 %v742
    %858 = vmatpush1.msra.mxu0 %v741
    %859 = vmatprep.subr.mxu0 %v746
    %860 = vmatpush1.msra.mxu0 %v745
    %861 = vmatprep.subr.mxu0 %v750
    %862 = vmatpush1.msra.mxu0 %v749
    %863 = vmatprep.subr.mxu0 %v754
    %864 = vmatpush1.msra.mxu0 %v753
    %865 = vmatprep.subr.mxu0 %v758
    %866 = vmatpush1.msra.mxu0 %v757
    %867 = vmatprep.subr.mxu0 %v762
    %868 = vmatpush1.msra.mxu0 %v761
    %869 = vmatprep.subr.mxu0 %v766
    %870 = vmatpush1.msra.mxu0 %v765
    %871 = vmatprep.subr.mxu0 %v770
    %872 = vmatpush1.msra.mxu0 %v769
    %873 = vmatprep.subr.mxu0 %v774
    %874 = vmatpush1.msra.mxu0 %v773
    %875 = vmatprep.subr.mxu0 %v778
    %876 = vmatpush1.msra.mxu0 %v777
    %877 = vmatprep.subr.mxu0 %v782
    %878 = vmatpush1.msra.mxu0 %v781
    %879 = vmatprep.subr.mxu0 %v786
    %880 = vmatpush1.msra.mxu0 %v785
    %881 = vmatprep.subr.mxu0 %v790
    %882 = vmatpush1.msra.mxu0 %v789
    %883 = vmatprep.subr.mxu0 %v794
    %884 = vmatpush1.msra.mxu0 %v793
    %885 = vmatprep.subr.mxu0 %v798
    %886 = vmatpush1.msra.mxu0 %v797
    %887 = vmatprep.mubr.f32.mxu0 %v672
    %888 = vmatmul.mubr.f32.gmra.mrb[0].mxu0 %v671
    %v889 = vpop.f32.mrb[0].mxu0
    %v890 = vadd.f32 %v806, %v889
    %v891 = vpop.f32.mrb[0].mxu0
    %v892 = vadd.f32 %v810, %v891
    %893 = vdwg.mxu0
    %894 = vmatprep.subr.mxu0 %v676
    %895 = vmatpush1.msra.mxu0 %v675
    %896 = vmatprep.subr.mxu0 %v680
    %897 = vmatpush1.msra.mxu0 %v679
    %898 = vmatprep.subr.mxu0 %v684
    %899 = vmatpush1.msra.mxu0 %v683
    %900 = vmatprep.subr.mxu0 %v688
    %901 = vmatpush1.msra.mxu0 %v687
    %902 = vmatprep.subr.mxu0 %v692
    %903 = vmatpush1.msra.mxu0 %v691
    %904 = vmatprep.subr.mxu0 %v696
    %905 = vmatpush1.msra.mxu0 %v695
    %906 = vmatprep.subr.mxu0 %v700
    %907 = vmatpush1.msra.mxu0 %v699
    %908 = vmatprep.subr.mxu0 %v704
    %909 = vmatpush1.msra.mxu0 %v703
    %910 = vmatprep.subr.mxu0 %v708
    %911 = vmatpush1.msra.mxu0 %v707
    %912 = vmatprep.subr.mxu0 %v712
    %913 = vmatpush1.msra.mxu0 %v711
    %914 = vmatprep.subr.mxu0 %v716
    %915 = vmatpush1.msra.mxu0 %v715
    %916 = vmatprep.subr.mxu0 %v720
    %917 = vmatpush1.msra.mxu0 %v719
    %918 = vmatprep.subr.mxu0 %v724
    %919 = vmatpush1.msra.mxu0 %v723
    %920 = vmatprep.subr.mxu0 %v728
    %921 = vmatpush1.msra.mxu0 %v727
    %922 = vmatprep.subr.mxu0 %v732
    %923 = vmatpush1.msra.mxu0 %v731
    %924 = vmatprep.subr.mxu0 %v736
    %925 = vmatpush1.msra.mxu0 %v735
    %926 = vmatprep.subr.mxu0 %v740
    %927 = vmatpush1.msra.mxu0 %v739
    %928 = vmatprep.subr.mxu0 %v744
    %929 = vmatpush1.msra.mxu0 %v743
    %930 = vmatprep.subr.mxu0 %v748
    %931 = vmatpush1.msra.mxu0 %v747
    %932 = vmatprep.subr.mxu0 %v752
    %933 = vmatpush1.msra.mxu0 %v751
    %934 = vmatprep.subr.mxu0 %v756
    %935 = vmatpush1.msra.mxu0 %v755
    %936 = vmatprep.subr.mxu0 %v760
    %937 = vmatpush1.msra.mxu0 %v759
    %938 = vmatprep.subr.mxu0 %v764
    %939 = vmatpush1.msra.mxu0 %v763
    %940 = vmatprep.subr.mxu0 %v768
    %941 = vmatpush1.msra.mxu0 %v767
    %942 = vmatprep.subr.mxu0 %v772
    %943 = vmatpush1.msra.mxu0 %v771
    %944 = vmatprep.subr.mxu0 %v776
    %945 = vmatpush1.msra.mxu0 %v775
    %946 = vmatprep.subr.mxu0 %v780
    %947 = vmatpush1.msra.mxu0 %v779
    %948 = vmatprep.subr.mxu0 %v784
    %949 = vmatpush1.msra.mxu0 %v783
    %950 = vmatprep.subr.mxu0 %v788
    %951 = vmatpush1.msra.mxu0 %v787
    %952 = vmatprep.subr.mxu0 %v792
    %953 = vmatpush1.msra.mxu0 %v791
    %954 = vmatprep.subr.mxu0 %v796
    %955 = vmatpush1.msra.mxu0 %v795
    %956 = vmatprep.subr.mxu0 %v800
    %957 = vmatpush1.msra.mxu0 %v799
    %958 = vmatprep.mubr.f32.mxu0 %v672
    %959 = vmatmul.mubr.f32.gmra.mrb[0].mxu0 %v671
    %v960 = vpop.f32.mrb[0].mxu0
    %v961 = vadd.f32 %v814, %v960
    %v962 = vpop.f32.mrb[0].mxu0
    %v963 = vadd.f32 %v818, %v962
    %964 = vdwg.mxu0
    %v965 = vxor.u32 %v890, 2147483648
    %v966 = vmul.f32 %v965, 1.442695
    %v967 = vpow.pop %v966
    %v968 = vadd.f32 %v967, 1.0
    %v969 = vrcp.pop %v968
    %v970 = vmul.f32 1.0, %v969
    %v971 = vxor.u32 %v892, 2147483648
    %v972 = vmul.f32 %v971, 1.442695
    %v973 = vpow.pop %v972
    %v974 = vadd.f32 %v973, 1.0
    %v975 = vrcp.pop %v974
    %v976 = vmul.f32 1.0, %v975
    %v977 = vtanh.pop %v961
    %v978 = vxor.u32 %v963, 2147483648
    %v979 = vmul.f32 %v978, 1.442695
    %v980 = vpow.pop %v979
    %v981 = vadd.f32 %v980, 1.0
    %v982 = vrcp.pop %v981
    %v983 = vmul.f32 1.0, %v982
    %v984 = vld [vmem:[%s3] sm:$0xff]
    %v985 = vmul.f32 %v976, %v984
    %v986 = vmul.f32 %v970, %v977
    %v987 = vadd.f32 %v985, %v986
    %v988 = vtanh.pop %v987
    %v989 = vmul.f32 %v983, %v988
    %990 = vst [vmem:[%s11] sm:$0xff] %v989
    %991 = vst [vmem:[%s12] sm:$0xff] %v987
    %v992 = vld [vmem:[%s13] sm:$0xff]
    %v993 = vld [vmem:[#allocation3] sm:$0xff]
    %995 = vset.pattern.permute.xlu0 0
    %996 = vperm.xlu0 %995, %v993
    %v997 = vpop.permute.xlu0 %996
    %v999 = vsub.f32 %v992, %v997
    %v1000 = vmul.f32 %v999, 1.442695
    %v1001 = vpow.pop %v1000
    %v1002 = vmul.f32 %v1001, %v665
    %1003 = vst.msk [vmem:[%s13] sm:$0xff] %vm491, %v1002
  $region53: #{lstm_attn_decoder.1} parent=0 // pred_fallthru
    _
  // Predicated region
  $region54: #{lstm_attn_decoder.1} parent=0 // pred_check
    _
  $region55: #{lstm_attn_decoder.1} parent=0 // pred_check_branch
    %1005 = sbr.rel (0) target = $region57
  $region56: #{lstm_attn_decoder.1} parent=0 // pred_region
    _
  $region57: #{lstm_attn_decoder.1} parent=0 // pred_fallthru
    _
  // Predicated region
  $region58: #{lstm_attn_decoder.1} parent=0 // pred_check
    _
  $region59: #{lstm_attn_decoder.1} parent=0 // pred_check_branch
    %1007 = sbr.rel (0) target = $region61
  $region60: #{lstm_attn_decoder.1} parent=0 // pred_region
    _
  $region61: #{lstm_attn_decoder.1} parent=0 // pred_fallthru
    _
  // Predicated region
  $region62: #{lstm_attn_decoder.1} parent=0 // pred_check
    _
  $region63: #{lstm_attn_decoder.1} parent=0 // pred_check_branch
    %1009 = sbr.rel (0) target = $region65
  $region64: #{lstm_attn_decoder.1} parent=0 // pred_region
    _
  $region65: #{lstm_attn_decoder.1} parent=0 // pred_fallthru
    _
  // Predicated region
  $region66: #{lstm_attn_decoder.1} parent=0 // pred_check
    _
  $region67: #{lstm_attn_decoder.1} parent=0 // pred_check_branch
    %1011 = sbr.rel (0) target = $region69
  $region68: #{lstm_attn_decoder.1} parent=0 // pred_region
    _
  $region69: #{lstm_attn_decoder.1} parent=0 // pred_fallthru
    _
  // Predicated region
  $region70: #{lstm_attn_decoder.1} parent=0 // pred_check
    _
  $region71: #{lstm_attn_decoder.1} parent=0 // pred_check_branch
    %1013 = sbr.rel (0) target = $region73
  $region72: #{lstm_attn_decoder.1} parent=0 // pred_region
    _
  $region73: #{lstm_attn_decoder.1} parent=0 // pred_fallthru
    _
  // Predicated region
  $region74: #{lstm_attn_decoder.1} parent=0 // pred_check
    _
  $region75: #{lstm_attn_decoder.1} parent=0 // pred_check_branch
    %1015 = sbr.rel (0) target = $region77
  $region76: #{lstm_attn_decoder.1} parent=0 // pred_region
    _
  $region77: #{lstm_attn_decoder.1} parent=0 // pred_fallthru
    _

</llo_original>
